<compile_context>
chip_gen: v5e
topology: v5e:2x2
jax: 0.10.0
libtpu: 0.0.40
codegen_flags: <defaults>
</compile_context>

<pallas_src>
import jax
import jax.numpy as jnp
from jax.experimental import pallas as pl
from jax.experimental.pallas import tpu as pltpu


def classifier_kernel(x_ref, w_ref, b_ref, o_ref):
    # x_ref: (TN, Cin, HW) | w_ref: (K, Cin) | b_ref: (K, 1) | o_ref: (TN, K)
    tn, _, hw = x_ref.shape
    k, cin = w_ref.shape
    inv_hw = 1.0 / float(hw)  # compile-time scalar

    x = x_ref[...]            # (TN, Cin, HW) — streamed block
    w = w_ref[...]            # (K, Cin)      — resident across the grid
    b = b_ref[...]            # (K, 1)

    # Dropout(p=0.5) is an inference-time identity -> no-op in the kernel.

    # One batched MXU contraction over the whole tile (batch dim = TN images):
    #   (TN, K, Cin) @ (TN, Cin, HW) -> (TN, K, HW), accumulated in f32.
    # The weight is replicated along the leading (batch) dim once per grid step;
    # this is cheap vreg replication and is hidden under the HBM activation DMA.
    wb = jnp.broadcast_to(w[None, :, :], (tn, k, cin))
    y = jax.lax.dot_general(
        wb, x,
        dimension_numbers=(((2,), (1,)), ((0,), (0,))),   # 'nkc,ncx->nkx'
        preferred_element_type=jnp.float32,
    )                                                      # (TN, K, HW)

    # Bias + ReLU once on the whole tile (VPU), then AdaptiveAvgPool2d((1,1)) as a
    # single lane-axis sum (XLU) * (1/HW).  One block store of the (TN, K) result.
    y = jnp.maximum(y + b[None, :, :], 0.0)
    o_ref[...] = (jnp.sum(y, axis=-1) * inv_hw).astype(o_ref.dtype)


def _round_up(x, m):
    return (x + m - 1) // m * m


def _vmem_budget_bytes():
    """Generation-aware VMEM limit and per-block activation budget."""
    try:
        cap = int(pltpu.get_tpu_info().vmem_capacity_bytes)
    except Exception:
        cap = 64 << 20                       # assume the tightest chip (v7x) if unknown
    vmem_limit = min((cap * 3) // 4, 96 << 20)      # 48 MiB on v7x, 96 MiB on v5e/v6e
    block_budget = min(vmem_limit // 3, 32 << 20)   # 16 MiB on v7x, 32 MiB on v5e/v6e
    return vmem_limit, block_budget


def _pick_batch_tile(n, per_image_vmem_bytes, block_budget, max_tn=64):
    """Pick (TN, N_pad): TN is a multiple of 8 (sublane-aligned output block) that
    divides the padded batch, keeps the double-buffered activation stream within the
    VMEM budget, and leaves >= 2 grid steps when the batch is large enough."""
    n_pad = _round_up(max(n, 1), 8)
    cap = (block_budget // max(per_image_vmem_bytes, 1)) // 8 * 8
    cap = max(8, min(max_tn, cap))
    if n_pad >= 16:
        cap = max(8, min(cap, (n_pad // 2) // 8 * 8))   # keep the grid at >= 2 steps
    tn = 8
    for t in range(8, cap + 1, 8):
        if n_pad % t == 0:
            tn = t
    return tn, n_pad


def squeezenet_classifier(x_nchw, w_kc, bias_k):
    """Inference forward of SqueezeNetClassifier.
    x_nchw: (N, 512, H, W); w_kc: (K, 512) (= torch weight[:, :, 0, 0]); bias_k: (K,).
    Returns (N, K), matching torch.flatten(classifier(x), 1)."""
    N, Cin, H, W = x_nchw.shape
    K = w_kc.shape[0]
    HW = H * W

    x = x_nchw.reshape(N, Cin, HW)     # free reshape — no HBM transpose
    b2 = bias_k.reshape(K, 1)

    vmem_limit, block_budget = _vmem_budget_bytes()
    # Lane-padding-aware per-image footprint of the (Cin, HW) tile in VMEM.
    per_image_bytes = Cin * _round_up(HW, 128) * x.dtype.itemsize
    TN, N_pad = _pick_batch_tile(N, per_image_bytes, block_budget)

    if N_pad != N:
        # Pad the batch with zero images; the corresponding output rows are sliced off.
        x = jnp.pad(x, ((0, N_pad - N), (0, 0), (0, 0)))
    grid = (N_pad // TN,)

    # TODO(synk): optionally stream x (and w) as bf16 with the f32 MXU accumulator for an
    # up-to-2x HBM-roofline win; kept f32 here for exact parity with the PyTorch module.
    out = pl.pallas_call(
        classifier_kernel,
        out_shape=jax.ShapeDtypeStruct((N_pad, K), x.dtype),
        grid_spec=pltpu.PrefetchScalarGridSpec(
            num_scalar_prefetch=0,
            grid=grid,
            in_specs=[
                # Activation stream: tiled over the batch, auto double-buffered by Pallas.
                pl.BlockSpec((TN, Cin, HW), lambda i: (i, 0, 0)),
                # Weights / bias: small, constant index_map -> resident across the grid.
                # (For very large num_classes, pin with pipeline_mode=pl.Buffered(1).)
                pl.BlockSpec((K, Cin), lambda i: (0, 0)),
                pl.BlockSpec((K, 1), lambda i: (0, 0)),
            ],
            out_specs=pl.BlockSpec((TN, K), lambda i: (i, 0)),
        ),
        compiler_params=pltpu.CompilerParams(
            # On v7x, pltpu.CORE_PARALLEL / an explicit core_map would shard the batch
            # grid across both TensorCores; "parallel" is kept for portability here.
            dimension_semantics=("parallel",),
            vmem_limit_bytes=vmem_limit,
        ),
    )(x, w_kc, b2)

    return out[:N]


def reference(x_nchw, w_kc, bias_k):
    N, Cin, H, W = x_nchw.shape
    x = x_nchw.reshape(N, Cin, H * W)
    y = jnp.einsum('ncx,kc->nkx', x, w_kc, precision='highest') + bias_k[None, :, None]
    y = jnp.maximum(y, 0.0)
    return jnp.mean(y, axis=-1)  # (N, K)


if __name__ == "__main__":
    # Small shapes consistent with the module (Cin is fixed to 512 by final_conv).
    # N=13 deliberately exercises batch padding (13 -> 16) and a 2-step grid.
    N, Cin, H, W = 13, 512, 8, 8
    num_classes = 10

    key = jax.random.PRNGKey(0)
    kx, kw, kb = jax.random.split(key, 3)

    x = jax.random.normal(kx, (N, Cin, H, W), dtype=jnp.float32)
    # PyTorch final_conv.weight has shape (K, 512, 1, 1) -> squeeze to (K, 512).
    w_torch = 0.05 * jax.random.normal(kw, (num_classes, Cin, 1, 1), dtype=jnp.float32)
    b = 0.05 * jax.random.normal(kb, (num_classes,), dtype=jnp.float32)
    w_kc = w_torch[:, :, 0, 0]   # (K, 512) — no transpose needed

    out = jax.block_until_ready(squeezenet_classifier(x, w_kc, b))
    ref = jax.block_until_ready(reference(x, w_kc, b))

    assert out.shape == (N, num_classes), out.shape
    max_err = float(jnp.max(jnp.abs(out - ref)))
    assert jnp.allclose(out, ref, atol=2e-4, rtol=2e-4), f"max_err={max_err}"

    print("KERNEL_OK")
</pallas_src>

<mosaic_0001>
module attributes {stable_mosaic.version = 11 : i64} {
  func.func @classifier_kernel(%arg0: i32, %arg1: memref<8x512x64xf32, #tpu.memory_space<vmem>>, %arg2: memref<10x512xf32, #tpu.memory_space<vmem>>, %arg3: memref<10x1xf32, #tpu.memory_space<vmem>>, %arg4: memref<8x10xf32, #tpu.memory_space<vmem>>) attributes {dimension_semantics = [#tpu.dimension_semantics<parallel>], iteration_bounds = array<i64: 2>, scalar_prefetch = 0 : i64, scratch_operands = 0 : i64, tpu.core_type = #tpu.core_type<tc>, window_params = [{transform_indices = @transform_0, window_bounds = array<i64: 8, 512, 64>}, {pipeline_mode = #tpu.pipeline_mode<synchronous>, transform_indices = @transform_1, window_bounds = array<i64: 10, 512>}, {pipeline_mode = #tpu.pipeline_mode<synchronous>, transform_indices = @transform_2, window_bounds = array<i64: 10, 1>}, {transform_indices = @transform_3, window_bounds = array<i64: 8, 10>}]} {
    %c0 = arith.constant 0 : index
    %c0_0 = arith.constant 0 : index
    %c0_1 = arith.constant 0 : index
    %0 = vector.load %arg1[%c0, %c0_0, %c0_1] : memref<8x512x64xf32, #tpu.memory_space<vmem>>, vector<8x512x64xf32>
    %c0_2 = arith.constant 0 : index
    %c0_3 = arith.constant 0 : index
    %1 = vector.load %arg2[%c0_2, %c0_3] : memref<10x512xf32, #tpu.memory_space<vmem>>, vector<10x512xf32>
    %c0_4 = arith.constant 0 : index
    %c0_5 = arith.constant 0 : index
    %2 = vector.load %arg3[%c0_4, %c0_5] : memref<10x1xf32, #tpu.memory_space<vmem>>, vector<10x1xf32>
    %3 = vector.shape_cast %1 : vector<10x512xf32> to vector<1x10x512xf32>
    %4 = vector.shape_cast %3 : vector<1x10x512xf32> to vector<1x10x512xf32>
    %5 = vector.broadcast %4 : vector<1x10x512xf32> to vector<8x10x512xf32>
    %cst = arith.constant dense<0.000000e+00> : vector<8x10x64xf32>
    %6 = tpu.matmul %5, %0, %cst {dimension_numbers = #tpu.dot_dimension_numbers<[2], [1], [1], [2], [0, 0, 0, 1, 1, 2], [0], [0]>} : vector<8x10x512xf32>, vector<8x512x64xf32>, vector<8x10x64xf32> -> vector<8x10x64xf32>
    %7 = vector.shape_cast %2 : vector<10x1xf32> to vector<1x10x1xf32>
    %8 = vector.broadcast %7 : vector<1x10x1xf32> to vector<8x10x64xf32>
    %9 = arith.addf %6, %8 : vector<8x10x64xf32>
    %cst_6 = arith.constant 0.000000e+00 : f32
    %10 = vector.broadcast %cst_6 : f32 to vector<8x10x64xf32>
    %11 = arith.maximumf %9, %10 : vector<8x10x64xf32>
    %cst_7 = arith.constant dense<0.000000e+00> : vector<8x10xf32>
    %12 = vector.multi_reduction <add>, %11, %cst_7 [2] : vector<8x10x64xf32> to vector<8x10xf32>
    %cst_8 = arith.constant 1.562500e-02 : f32
    %13 = vector.broadcast %cst_8 : f32 to vector<8x10xf32>
    %14 = arith.mulf %12, %13 : vector<8x10xf32>
    %c0_9 = arith.constant 0 : index
    %c0_10 = arith.constant 0 : index
    %15 = vector.load %arg4[%c0_9, %c0_10] : memref<8x10xf32, #tpu.memory_space<vmem>>, vector<8x10xf32>
    tpu.vector_store %arg4[%c0_9, %c0_10], %14 {strides = array<i32>} : memref<8x10xf32, #tpu.memory_space<vmem>>, vector<8x10xf32>,
    return
  }
  func.func @transform_0(%arg0: i32) -> (i32, i32, i32) {
    %c0_i32 = arith.constant 0 : i32
    %c0_i32_0 = arith.constant 0 : i32
    %c0_i32_1 = arith.constant 0 : i32
    return %arg0, %c0_i32, %c0_i32_0 : i32, i32, i32
  }
  func.func @transform_1(%arg0: i32) -> (i32, i32) {
    %c0_i32 = arith.constant 0 : i32
    %c0_i32_0 = arith.constant 0 : i32
    %c0_i32_1 = arith.constant 0 : i32
    return %c0_i32, %c0_i32_0 : i32, i32
  }
  func.func @transform_2(%arg0: i32) -> (i32, i32) {
    %c0_i32 = arith.constant 0 : i32
    %c0_i32_0 = arith.constant 0 : i32
    %c0_i32_1 = arith.constant 0 : i32
    return %c0_i32, %c0_i32_0 : i32, i32
  }
  func.func @transform_3(%arg0: i32) -> (i32, i32) {
    %c0_i32 = arith.constant 0 : i32
    %c0_i32_0 = arith.constant 0 : i32
    return %arg0, %c0_i32 : i32, i32
  }
}

</mosaic_0001>

<llo_original>
// kernel: tpu_custom_call.1
$region0: #{tpu_custom_call.1}
  #allocation0 [shape = 'u32[]', space=smem, size = 0x4, offset = 0x4, fixed_abs, tag = 'smem constant byte address 0x4 - core index']
  #allocation1 [shape = 'u32[72,128]{1,0:T(1,128)}', space=vmem, size = 0x9000, scoped, tag = 'internal scratch']
  %s0 = inlined_call_operand.vmem [shape: f32[16,512,64], index: 0, kind: input, shape index: {}]
  %s1 = inlined_call_operand.vmem [shape: f32[10,512], index: 1, kind: input, shape index: {}]
  %s2 = inlined_call_operand.vmem [shape: f32[10,1], index: 2, kind: input, shape index: {}]
  %s3 = inlined_call_operand.hbm [shape: f32[16,10], index: 3, kind: output, shape index: {}]
  %s4 = sld [smem:[#allocation0]]
  $region45: #{tpu_custom_call.1} parent=0
    _
  %s6 = ssub.s32 1, %s4
  %s7 = scalar_select 0, %s6, %s4
  $region1: #{tpu_custom_call.1} parent=0
    #allocation2 [shape = 'u8[8192]{0}', space=vmem, size = 0x2000, scoped, tag = 'output window, operand 0']
    #allocation3 [shape = 's32[2]{0}', space=sflag, size = 0x8, scoped, tag = 'scoped memory for tpu_custom_call.1']
    %8 = vsyncpa [#allocation3], 0
    %s9 = scalar_lea.sflag [#allocation3], 1
    %10 = vsyncpa %s9, 0
    loop: start=0, step=1, limit=4
    $region2: #{tpu_custom_call.1} parent=1 // loop_pre_header
      _
    $region3: #{tpu_custom_call.1} parent=1 // loop_header
      %s12 = sphi 0, %s16
      %p13 = scmp.ge.s32.totalorder %s12, 4
      %s22 = sphi 0, %s24
      %s25 = sphi 0, %s22
      %s26 = sphi 0, %s25
      %s42 = sphi 0, %s26
      %s46 = sphi 0, %s46
      %s48 = sphi 0, %s46
      %s49 = sphi 0, %s48
      %s63 = sphi 0, %s49
      %s67 = sphi 0, %s67
      %s69 = sphi 0, %s67
      %s70 = sphi 0, %s69
      %s84 = sphi 0, %s70
      %s90 = sphi 0, %s92
      %s93 = sphi 0, %s90
      %s94 = sphi 0, %s93
      %s110 = sphi 0, %s94
    $region4: #{tpu_custom_call.1} parent=1 // loop_header_branch
      %15 = sbr.rel (%p13) target = $region8
    $region5: #{tpu_custom_call.1} parent=1 // loop_body
      %s17 = ssub.s32 %s12, 1
      %s18 = ssub.s32 %s12, 2
      %s19 = sadd.s32 %s12, 1
      %s20 = ssub.s32 %s12, %s19
      %p21 = scmp.eq.s32.totalorder %s20, 0
      %s23 = sadd.s32 %s22, 1
      %s24 = scalar_select %p21, %s22, %s23
      %p27 = pneg %p21
      %p28 = scmp.eq.s32.totalorder %s12, 1
      %p29 = por %p27, %p28
      %p30 = scmp.ne.s32.totalorder %s22, %s25
      %p31 = scmp.eq.s32.totalorder %s12, 0
      %p32 = por %p30, %p31
      %p33 = scmp.ne.s32.totalorder %s22, %s25
      %p34 = scmp.eq.s32.totalorder %s17, 1
      %p35 = por %p33, %p34
      %p36 = scmp.ne.s32.totalorder %s25, %s26
      %p37 = scmp.eq.s32.totalorder %s17, 0
      %p38 = por %p36, %p37
      %p39 = scmp.ne.s32.totalorder %s25, %s26
      %p40 = scmp.eq.s32.totalorder %s18, 1
      %p41 = por %p39, %p40
      %p43 = scmp.ne.s32.totalorder %s26, %s42
      %p44 = scmp.eq.s32.totalorder %s18, 0
      %p45 = por %p43, %p44
      %s47 = sadd.s32 %s46, 1
      %p50 = scmp.eq.s32.totalorder %s12, 1
      %p51 = scmp.ne.s32.totalorder %s46, %s48
      %p52 = scmp.eq.s32.totalorder %s12, 0
      %p53 = por %p51, %p52
      %p54 = scmp.ne.s32.totalorder %s46, %s48
      %p55 = scmp.eq.s32.totalorder %s17, 1
      %p56 = por %p54, %p55
      %p57 = scmp.ne.s32.totalorder %s48, %s49
      %p58 = scmp.eq.s32.totalorder %s17, 0
      %p59 = por %p57, %p58
      %p60 = scmp.ne.s32.totalorder %s48, %s49
      %p61 = scmp.eq.s32.totalorder %s18, 1
      %p62 = por %p60, %p61
      %p64 = scmp.ne.s32.totalorder %s49, %s63
      %p65 = scmp.eq.s32.totalorder %s18, 0
      %p66 = por %p64, %p65
      %s68 = sadd.s32 %s67, 1
      %p71 = scmp.eq.s32.totalorder %s12, 1
      %p72 = scmp.ne.s32.totalorder %s67, %s69
      %p73 = scmp.eq.s32.totalorder %s12, 0
      %p74 = por %p72, %p73
      %p75 = scmp.ne.s32.totalorder %s67, %s69
      %p76 = scmp.eq.s32.totalorder %s17, 1
      %p77 = por %p75, %p76
      %p78 = scmp.ne.s32.totalorder %s69, %s70
      %p79 = scmp.eq.s32.totalorder %s17, 0
      %p80 = por %p78, %p79
      %p81 = scmp.ne.s32.totalorder %s69, %s70
      %p82 = scmp.eq.s32.totalorder %s18, 1
      %p83 = por %p81, %p82
      %p85 = scmp.ne.s32.totalorder %s70, %s84
      %p86 = scmp.eq.s32.totalorder %s18, 0
      %p87 = por %p85, %p86
      %s88 = ssub.s32 %s12, %s19
      %p89 = scmp.eq.s32.totalorder %s88, 0
      %s91 = sadd.s32 %s90, 1
      %s92 = scalar_select %p89, %s90, %s91
      %p95 = pneg %p89
      %p96 = scmp.eq.s32.totalorder %s12, 1
      %p97 = por %p95, %p96
      %p98 = scmp.ne.s32.totalorder %s90, %s93
      %p99 = scmp.eq.s32.totalorder %s12, 0
      %p100 = por %p98, %p99
      %p101 = scmp.ne.s32.totalorder %s90, %s93
      %p102 = scmp.eq.s32.totalorder %s17, 1
      %p103 = por %p101, %p102
      %p104 = scmp.ne.s32.totalorder %s93, %s94
      %p105 = scmp.eq.s32.totalorder %s17, 0
      %p106 = por %p104, %p105
      %p107 = scmp.ne.s32.totalorder %s93, %s94
      %p108 = scmp.eq.s32.totalorder %s18, 1
      %p109 = por %p107, %p108
      %p111 = scmp.ne.s32.totalorder %s94, %s110
      %p112 = scmp.eq.s32.totalorder %s18, 0
      %p113 = por %p111, %p112
      %p114 = scmp.le.s32.totalorder 1, %s12
      %p115 = scmp.lt.s32.totalorder %s12, 3
      %p116 = pnand %p114, %p115
      %p117 = pneg %p116
      // Predicated region
      $region9: #{tpu_custom_call.1} parent=5 // pred_check
        _
      $region10: #{tpu_custom_call.1} parent=5 // pred_check_branch
        %119 = sbr.rel (%p116) target = $region12
      $region11: #{tpu_custom_call.1} parent=5 // pred_region
        %s120 = ssub.s32 %s12, 1
        // Predicated region
        $region13: #{tpu_custom_call.1} parent=11 // pred_check
          %p121 = pneg %p59
        $region14: #{tpu_custom_call.1} parent=11 // pred_check_branch
          %123 = sbr.rel (%p121) target = $region16
        $region15: #{tpu_custom_call.1} parent=11 // pred_region
          _
        $region16: #{tpu_custom_call.1} parent=11 // pred_fallthru
          _
        // Predicated region
        $region17: #{tpu_custom_call.1} parent=11 // pred_check
          %p124 = pneg %p80
        $region18: #{tpu_custom_call.1} parent=11 // pred_check_branch
          %126 = sbr.rel (%p124) target = $region20
        $region19: #{tpu_custom_call.1} parent=11 // pred_region
          _
        $region20: #{tpu_custom_call.1} parent=11 // pred_fallthru
          _
      $region12: #{tpu_custom_call.1} parent=5 // pred_fallthru
        _
      %p127 = scmp.lt.s32.totalorder %s12, 2
      // Predicated region
      $region21: #{tpu_custom_call.1} parent=5 // pred_check
        %p128 = pneg %p127
      $region22: #{tpu_custom_call.1} parent=5 // pred_check_branch
        %130 = sbr.rel (%p128) target = $region24
      $region23: #{tpu_custom_call.1} parent=5 // pred_region
        // Predicated region
        $region25: #{tpu_custom_call.1} parent=23 // pred_check
          %p131 = pneg %p32
        $region26: #{tpu_custom_call.1} parent=23 // pred_check_branch
          %133 = sbr.rel (%p131) target = $region28
        $region27: #{tpu_custom_call.1} parent=23 // pred_region
          %s134 = smul.u32 8, %s12
          %p135 = scmp.lt.s32.totalorder %s134, 15
          %s136 = scalar_select %p135, %s134, 15
          %s137 = smul.addr %s136, 64
          %s138 = smul.addr %s137, 8
          %s139 = scalar_lea.vmem %s0, %s138
          %s140 = smul.u32 8, %s12
        $region28: #{tpu_custom_call.1} parent=23 // pred_fallthru
          _
      $region24: #{tpu_custom_call.1} parent=5 // pred_fallthru
        _
      %p141 = scmp.le.s32.totalorder 1, %s12
      %p142 = scmp.lt.s32.totalorder %s12, 3
      %p143 = pnand %p141, %p142
      %p144 = pneg %p143
      // Predicated region
      $region29: #{tpu_custom_call.1} parent=5 // pred_check
        _
      $region30: #{tpu_custom_call.1} parent=5 // pred_check_branch
        %146 = sbr.rel (%p143) target = $region32
      $region31: #{tpu_custom_call.1} parent=5 // pred_region
        %s147 = ssub.s32 %s12, 1
        %s148 = smul.u32 8, %s17
        %p149 = scmp.lt.s32.totalorder %s148, 15
        %s150 = scalar_select %p149, %s148, 15
        %s151 = smul.addr %s150, 64
        %s152 = smul.addr %s151, 8
        %s153 = scalar_lea.vmem %s0, %s152
        %p154 = pneg %p38
        %p155 = pneg %p35
        %p156 = pneg %p59
        %p157 = pneg %p56
        %p158 = pneg %p80
        %p159 = pneg %p77
        %p160 = pneg %p106
        %p161 = pneg %p103
        %s162 = sand.u32 %s93, 1
        %s163 = scalar_lea.sflag [#allocation3], %s162
        %s164 = sand.u32 %s93, 1
        %s165 = smul.addr %s164, 8
        %s166 = scalar_lea.vmem [#allocation2], %s165
        %s167 = smul.u32 8, %s17
        %p168 = scmp.lt.s32.totalorder %s167, 15
        %s169 = scalar_select %p168, %s167, 15
        %s170 = smul.addr %s169, 64
        %s171 = smul.addr %s170, 8
        %s172 = scalar_lea.vmem %s0, %s171
        %s173 = smul.u32 8, %s17
        %v174 = vld [vmem:[%s172] sm:$0xff]
        %v175 = vld [vmem:[%s172 + $0x8] sm:$0xff]
        %v176 = vld [vmem:[%s172 + $0x10] sm:$0xff]
        %v177 = vld [vmem:[%s172 + $0x18] sm:$0xff]
        %v178 = vld [vmem:[%s172 + $0x20] sm:$0xff]
        %v179 = vld [vmem:[%s172 + $0x28] sm:$0xff]
        %v180 = vld [vmem:[%s172 + $0x30] sm:$0xff]
        %v181 = vld [vmem:[%s172 + $0x38] sm:$0xff]
        %v182 = vld [vmem:[%s172 + $0x40] sm:$0xff]
        %v183 = vld [vmem:[%s172 + $0x48] sm:$0xff]
        %v184 = vld [vmem:[%s172 + $0x50] sm:$0xff]
        %v185 = vld [vmem:[%s172 + $0x58] sm:$0xff]
        %v186 = vld [vmem:[%s172 + $0x60] sm:$0xff]
        %v187 = vld [vmem:[%s172 + $0x68] sm:$0xff]
        %v188 = vld [vmem:[%s172 + $0x70] sm:$0xff]
        %v189 = vld [vmem:[%s172 + $0x78] sm:$0xff]
        %v190 = vld [vmem:[%s172 + $0x80] sm:$0xff]
        %v191 = vld [vmem:[%s172 + $0x88] sm:$0xff]
        %v192 = vld [vmem:[%s172 + $0x90] sm:$0xff]
        %v193 = vld [vmem:[%s172 + $0x98] sm:$0xff]
        %v194 = vld [vmem:[%s172 + $0xa0] sm:$0xff]
        %v195 = vld [vmem:[%s172 + $0xa8] sm:$0xff]
        %v196 = vld [vmem:[%s172 + $0xb0] sm:$0xff]
        %v197 = vld [vmem:[%s172 + $0xb8] sm:$0xff]
        %v198 = vld [vmem:[%s172 + $0xc0] sm:$0xff]
        %v199 = vld [vmem:[%s172 + $0xc8] sm:$0xff]
        %v200 = vld [vmem:[%s172 + $0xd0] sm:$0xff]
        %v201 = vld [vmem:[%s172 + $0xd8] sm:$0xff]
        %v202 = vld [vmem:[%s172 + $0xe0] sm:$0xff]
        %v203 = vld [vmem:[%s172 + $0xe8] sm:$0xff]
        %v204 = vld [vmem:[%s172 + $0xf0] sm:$0xff]
        %v205 = vld [vmem:[%s172 + $0xf8] sm:$0xff]
        %v206 = vld [vmem:[%s172 + $0x100] sm:$0xff]
        %v207 = vld [vmem:[%s172 + $0x108] sm:$0xff]
        %v208 = vld [vmem:[%s172 + $0x110] sm:$0xff]
        %v209 = vld [vmem:[%s172 + $0x118] sm:$0xff]
        %v210 = vld [vmem:[%s172 + $0x120] sm:$0xff]
        %v211 = vld [vmem:[%s172 + $0x128] sm:$0xff]
        %v212 = vld [vmem:[%s172 + $0x130] sm:$0xff]
        %v213 = vld [vmem:[%s172 + $0x138] sm:$0xff]
        %v214 = vld [vmem:[%s172 + $0x140] sm:$0xff]
        %v215 = vld [vmem:[%s172 + $0x148] sm:$0xff]
        %v216 = vld [vmem:[%s172 + $0x150] sm:$0xff]
        %v217 = vld [vmem:[%s172 + $0x158] sm:$0xff]
        %v218 = vld [vmem:[%s172 + $0x160] sm:$0xff]
        %v219 = vld [vmem:[%s172 + $0x168] sm:$0xff]
        %v220 = vld [vmem:[%s172 + $0x170] sm:$0xff]
        %v221 = vld [vmem:[%s172 + $0x178] sm:$0xff]
        %v222 = vld [vmem:[%s172 + $0x180] sm:$0xff]
        %v223 = vld [vmem:[%s172 + $0x188] sm:$0xff]
        %v224 = vld [vmem:[%s172 + $0x190] sm:$0xff]
        %v225 = vld [vmem:[%s172 + $0x198] sm:$0xff]
        %v226 = vld [vmem:[%s172 + $0x1a0] sm:$0xff]
        %v227 = vld [vmem:[%s172 + $0x1a8] sm:$0xff]
        %v228 = vld [vmem:[%s172 + $0x1b0] sm:$0xff]
        %v229 = vld [vmem:[%s172 + $0x1b8] sm:$0xff]
        %v230 = vld [vmem:[%s172 + $0x1c0] sm:$0xff]
        %v231 = vld [vmem:[%s172 + $0x1c8] sm:$0xff]
        %v232 = vld [vmem:[%s172 + $0x1d0] sm:$0xff]
        %v233 = vld [vmem:[%s172 + $0x1d8] sm:$0xff]
        %v234 = vld [vmem:[%s172 + $0x1e0] sm:$0xff]
        %v235 = vld [vmem:[%s172 + $0x1e8] sm:$0xff]
        %v236 = vld [vmem:[%s172 + $0x1f0] sm:$0xff]
        %v237 = vld [vmem:[%s172 + $0x1f8] sm:$0xff]
        %v238 = vld [vmem:[%s172 + $0x200] sm:$0xff]
        %v239 = vld [vmem:[%s172 + $0x208] sm:$0xff]
        %v240 = vld [vmem:[%s172 + $0x210] sm:$0xff]
        %v241 = vld [vmem:[%s172 + $0x218] sm:$0xff]
        %v242 = vld [vmem:[%s172 + $0x220] sm:$0xff]
        %v243 = vld [vmem:[%s172 + $0x228] sm:$0xff]
        %v244 = vld [vmem:[%s172 + $0x230] sm:$0xff]
        %v245 = vld [vmem:[%s172 + $0x238] sm:$0xff]
        %v246 = vld [vmem:[%s172 + $0x240] sm:$0xff]
        %v247 = vld [vmem:[%s172 + $0x248] sm:$0xff]
        %v248 = vld [vmem:[%s172 + $0x250] sm:$0xff]
        %v249 = vld [vmem:[%s172 + $0x258] sm:$0xff]
        %v250 = vld [vmem:[%s172 + $0x260] sm:$0xff]
        %v251 = vld [vmem:[%s172 + $0x268] sm:$0xff]
        %v252 = vld [vmem:[%s172 + $0x270] sm:$0xff]
        %v253 = vld [vmem:[%s172 + $0x278] sm:$0xff]
        %v254 = vld [vmem:[%s172 + $0x280] sm:$0xff]
        %v255 = vld [vmem:[%s172 + $0x288] sm:$0xff]
        %v256 = vld [vmem:[%s172 + $0x290] sm:$0xff]
        %v257 = vld [vmem:[%s172 + $0x298] sm:$0xff]
        %v258 = vld [vmem:[%s172 + $0x2a0] sm:$0xff]
        %v259 = vld [vmem:[%s172 + $0x2a8] sm:$0xff]
        %v260 = vld [vmem:[%s172 + $0x2b0] sm:$0xff]
        %v261 = vld [vmem:[%s172 + $0x2b8] sm:$0xff]
        %v262 = vld [vmem:[%s172 + $0x2c0] sm:$0xff]
        %v263 = vld [vmem:[%s172 + $0x2c8] sm:$0xff]
        %v264 = vld [vmem:[%s172 + $0x2d0] sm:$0xff]
        %v265 = vld [vmem:[%s172 + $0x2d8] sm:$0xff]
        %v266 = vld [vmem:[%s172 + $0x2e0] sm:$0xff]
        %v267 = vld [vmem:[%s172 + $0x2e8] sm:$0xff]
        %v268 = vld [vmem:[%s172 + $0x2f0] sm:$0xff]
        %v269 = vld [vmem:[%s172 + $0x2f8] sm:$0xff]
        %v270 = vld [vmem:[%s172 + $0x300] sm:$0xff]
        %v271 = vld [vmem:[%s172 + $0x308] sm:$0xff]
        %v272 = vld [vmem:[%s172 + $0x310] sm:$0xff]
        %v273 = vld [vmem:[%s172 + $0x318] sm:$0xff]
        %v274 = vld [vmem:[%s172 + $0x320] sm:$0xff]
        %v275 = vld [vmem:[%s172 + $0x328] sm:$0xff]
        %v276 = vld [vmem:[%s172 + $0x330] sm:$0xff]
        %v277 = vld [vmem:[%s172 + $0x338] sm:$0xff]
        %v278 = vld [vmem:[%s172 + $0x340] sm:$0xff]
        %v279 = vld [vmem:[%s172 + $0x348] sm:$0xff]
        %v280 = vld [vmem:[%s172 + $0x350] sm:$0xff]
        %v281 = vld [vmem:[%s172 + $0x358] sm:$0xff]
        %v282 = vld [vmem:[%s172 + $0x360] sm:$0xff]
        %v283 = vld [vmem:[%s172 + $0x368] sm:$0xff]
        %v284 = vld [vmem:[%s172 + $0x370] sm:$0xff]
        %v285 = vld [vmem:[%s172 + $0x378] sm:$0xff]
        %v286 = vld [vmem:[%s172 + $0x380] sm:$0xff]
        %v287 = vld [vmem:[%s172 + $0x388] sm:$0xff]
        %v288 = vld [vmem:[%s172 + $0x390] sm:$0xff]
        %v289 = vld [vmem:[%s172 + $0x398] sm:$0xff]
        %v290 = vld [vmem:[%s172 + $0x3a0] sm:$0xff]
        %v291 = vld [vmem:[%s172 + $0x3a8] sm:$0xff]
        %v292 = vld [vmem:[%s172 + $0x3b0] sm:$0xff]
        %v293 = vld [vmem:[%s172 + $0x3b8] sm:$0xff]
        %v294 = vld [vmem:[%s172 + $0x3c0] sm:$0xff]
        %v295 = vld [vmem:[%s172 + $0x3c8] sm:$0xff]
        %v296 = vld [vmem:[%s172 + $0x3d0] sm:$0xff]
        %v297 = vld [vmem:[%s172 + $0x3d8] sm:$0xff]
        %v298 = vld [vmem:[%s172 + $0x3e0] sm:$0xff]
        %v299 = vld [vmem:[%s172 + $0x3e8] sm:$0xff]
        %v300 = vld [vmem:[%s172 + $0x3f0] sm:$0xff]
        %v301 = vld [vmem:[%s172 + $0x3f8] sm:$0xff]
        %v302 = vld [vmem:[%s172 + $0x400] sm:$0xff]
        %v303 = vld [vmem:[%s172 + $0x408] sm:$0xff]
        %v304 = vld [vmem:[%s172 + $0x410] sm:$0xff]
        %v305 = vld [vmem:[%s172 + $0x418] sm:$0xff]
        %v306 = vld [vmem:[%s172 + $0x420] sm:$0xff]
        %v307 = vld [vmem:[%s172 + $0x428] sm:$0xff]
        %v308 = vld [vmem:[%s172 + $0x430] sm:$0xff]
        %v309 = vld [vmem:[%s172 + $0x438] sm:$0xff]
        %v310 = vld [vmem:[%s172 + $0x440] sm:$0xff]
        %v311 = vld [vmem:[%s172 + $0x448] sm:$0xff]
        %v312 = vld [vmem:[%s172 + $0x450] sm:$0xff]
        %v313 = vld [vmem:[%s172 + $0x458] sm:$0xff]
        %v314 = vld [vmem:[%s172 + $0x460] sm:$0xff]
        %v315 = vld [vmem:[%s172 + $0x468] sm:$0xff]
        %v316 = vld [vmem:[%s172 + $0x470] sm:$0xff]
        %v317 = vld [vmem:[%s172 + $0x478] sm:$0xff]
        %v318 = vld [vmem:[%s172 + $0x480] sm:$0xff]
        %v319 = vld [vmem:[%s172 + $0x488] sm:$0xff]
        %v320 = vld [vmem:[%s172 + $0x490] sm:$0xff]
        %v321 = vld [vmem:[%s172 + $0x498] sm:$0xff]
        %v322 = vld [vmem:[%s172 + $0x4a0] sm:$0xff]
        %v323 = vld [vmem:[%s172 + $0x4a8] sm:$0xff]
        %v324 = vld [vmem:[%s172 + $0x4b0] sm:$0xff]
        %v325 = vld [vmem:[%s172 + $0x4b8] sm:$0xff]
        %v326 = vld [vmem:[%s172 + $0x4c0] sm:$0xff]
        %v327 = vld [vmem:[%s172 + $0x4c8] sm:$0xff]
        %v328 = vld [vmem:[%s172 + $0x4d0] sm:$0xff]
        %v329 = vld [vmem:[%s172 + $0x4d8] sm:$0xff]
        %v330 = vld [vmem:[%s172 + $0x4e0] sm:$0xff]
        %v331 = vld [vmem:[%s172 + $0x4e8] sm:$0xff]
        %v332 = vld [vmem:[%s172 + $0x4f0] sm:$0xff]
        %v333 = vld [vmem:[%s172 + $0x4f8] sm:$0xff]
        %v334 = vld [vmem:[%s172 + $0x500] sm:$0xff]
        %v335 = vld [vmem:[%s172 + $0x508] sm:$0xff]
        %v336 = vld [vmem:[%s172 + $0x510] sm:$0xff]
        %v337 = vld [vmem:[%s172 + $0x518] sm:$0xff]
        %v338 = vld [vmem:[%s172 + $0x520] sm:$0xff]
        %v339 = vld [vmem:[%s172 + $0x528] sm:$0xff]
        %v340 = vld [vmem:[%s172 + $0x530] sm:$0xff]
        %v341 = vld [vmem:[%s172 + $0x538] sm:$0xff]
        %v342 = vld [vmem:[%s172 + $0x540] sm:$0xff]
        %v343 = vld [vmem:[%s172 + $0x548] sm:$0xff]
        %v344 = vld [vmem:[%s172 + $0x550] sm:$0xff]
        %v345 = vld [vmem:[%s172 + $0x558] sm:$0xff]
        %v346 = vld [vmem:[%s172 + $0x560] sm:$0xff]
        %v347 = vld [vmem:[%s172 + $0x568] sm:$0xff]
        %v348 = vld [vmem:[%s172 + $0x570] sm:$0xff]
        %v349 = vld [vmem:[%s172 + $0x578] sm:$0xff]
        %v350 = vld [vmem:[%s172 + $0x580] sm:$0xff]
        %v351 = vld [vmem:[%s172 + $0x588] sm:$0xff]
        %v352 = vld [vmem:[%s172 + $0x590] sm:$0xff]
        %v353 = vld [vmem:[%s172 + $0x598] sm:$0xff]
        %v354 = vld [vmem:[%s172 + $0x5a0] sm:$0xff]
        %v355 = vld [vmem:[%s172 + $0x5a8] sm:$0xff]
        %v356 = vld [vmem:[%s172 + $0x5b0] sm:$0xff]
        %v357 = vld [vmem:[%s172 + $0x5b8] sm:$0xff]
        %v358 = vld [vmem:[%s172 + $0x5c0] sm:$0xff]
        %v359 = vld [vmem:[%s172 + $0x5c8] sm:$0xff]
        %v360 = vld [vmem:[%s172 + $0x5d0] sm:$0xff]
        %v361 = vld [vmem:[%s172 + $0x5d8] sm:$0xff]
        %v362 = vld [vmem:[%s172 + $0x5e0] sm:$0xff]
        %v363 = vld [vmem:[%s172 + $0x5e8] sm:$0xff]
        %v364 = vld [vmem:[%s172 + $0x5f0] sm:$0xff]
        %v365 = vld [vmem:[%s172 + $0x5f8] sm:$0xff]
        %v366 = vld [vmem:[%s172 + $0x600] sm:$0xff]
        %v367 = vld [vmem:[%s172 + $0x608] sm:$0xff]
        %v368 = vld [vmem:[%s172 + $0x610] sm:$0xff]
        %v369 = vld [vmem:[%s172 + $0x618] sm:$0xff]
        %v370 = vld [vmem:[%s172 + $0x620] sm:$0xff]
        %v371 = vld [vmem:[%s172 + $0x628] sm:$0xff]
        %v372 = vld [vmem:[%s172 + $0x630] sm:$0xff]
        %v373 = vld [vmem:[%s172 + $0x638] sm:$0xff]
        %v374 = vld [vmem:[%s172 + $0x640] sm:$0xff]
        %v375 = vld [vmem:[%s172 + $0x648] sm:$0xff]
        %v376 = vld [vmem:[%s172 + $0x650] sm:$0xff]
        %v377 = vld [vmem:[%s172 + $0x658] sm:$0xff]
        %v378 = vld [vmem:[%s172 + $0x660] sm:$0xff]
        %v379 = vld [vmem:[%s172 + $0x668] sm:$0xff]
        %v380 = vld [vmem:[%s172 + $0x670] sm:$0xff]
        %v381 = vld [vmem:[%s172 + $0x678] sm:$0xff]
        %v382 = vld [vmem:[%s172 + $0x680] sm:$0xff]
        %v383 = vld [vmem:[%s172 + $0x688] sm:$0xff]
        %v384 = vld [vmem:[%s172 + $0x690] sm:$0xff]
        %v385 = vld [vmem:[%s172 + $0x698] sm:$0xff]
        %v386 = vld [vmem:[%s172 + $0x6a0] sm:$0xff]
        %v387 = vld [vmem:[%s172 + $0x6a8] sm:$0xff]
        %v388 = vld [vmem:[%s172 + $0x6b0] sm:$0xff]
        %v389 = vld [vmem:[%s172 + $0x6b8] sm:$0xff]
        %v390 = vld [vmem:[%s172 + $0x6c0] sm:$0xff]
        %v391 = vld [vmem:[%s172 + $0x6c8] sm:$0xff]
        %v392 = vld [vmem:[%s172 + $0x6d0] sm:$0xff]
        %v393 = vld [vmem:[%s172 + $0x6d8] sm:$0xff]
        %v394 = vld [vmem:[%s172 + $0x6e0] sm:$0xff]
        %v395 = vld [vmem:[%s172 + $0x6e8] sm:$0xff]
        %v396 = vld [vmem:[%s172 + $0x6f0] sm:$0xff]
        %v397 = vld [vmem:[%s172 + $0x6f8] sm:$0xff]
        %v398 = vld [vmem:[%s172 + $0x700] sm:$0xff]
        %v399 = vld [vmem:[%s172 + $0x708] sm:$0xff]
        %v400 = vld [vmem:[%s172 + $0x710] sm:$0xff]
        %v401 = vld [vmem:[%s172 + $0x718] sm:$0xff]
        %v402 = vld [vmem:[%s172 + $0x720] sm:$0xff]
        %v403 = vld [vmem:[%s172 + $0x728] sm:$0xff]
        %v404 = vld [vmem:[%s172 + $0x730] sm:$0xff]
        %v405 = vld [vmem:[%s172 + $0x738] sm:$0xff]
        %v406 = vld [vmem:[%s172 + $0x740] sm:$0xff]
        %v407 = vld [vmem:[%s172 + $0x748] sm:$0xff]
        %v408 = vld [vmem:[%s172 + $0x750] sm:$0xff]
        %v409 = vld [vmem:[%s172 + $0x758] sm:$0xff]
        %v410 = vld [vmem:[%s172 + $0x760] sm:$0xff]
        %v411 = vld [vmem:[%s172 + $0x768] sm:$0xff]
        %v412 = vld [vmem:[%s172 + $0x770] sm:$0xff]
        %v413 = vld [vmem:[%s172 + $0x778] sm:$0xff]
        %v414 = vld [vmem:[%s172 + $0x780] sm:$0xff]
        %v415 = vld [vmem:[%s172 + $0x788] sm:$0xff]
        %v416 = vld [vmem:[%s172 + $0x790] sm:$0xff]
        %v417 = vld [vmem:[%s172 + $0x798] sm:$0xff]
        %v418 = vld [vmem:[%s172 + $0x7a0] sm:$0xff]
        %v419 = vld [vmem:[%s172 + $0x7a8] sm:$0xff]
        %v420 = vld [vmem:[%s172 + $0x7b0] sm:$0xff]
        %v421 = vld [vmem:[%s172 + $0x7b8] sm:$0xff]
        %v422 = vld [vmem:[%s172 + $0x7c0] sm:$0xff]
        %v423 = vld [vmem:[%s172 + $0x7c8] sm:$0xff]
        %v424 = vld [vmem:[%s172 + $0x7d0] sm:$0xff]
        %v425 = vld [vmem:[%s172 + $0x7d8] sm:$0xff]
        %v426 = vld [vmem:[%s172 + $0x7e0] sm:$0xff]
        %v427 = vld [vmem:[%s172 + $0x7e8] sm:$0xff]
        %v428 = vld [vmem:[%s172 + $0x7f0] sm:$0xff]
        %v429 = vld [vmem:[%s172 + $0x7f8] sm:$0xff]
        %v430 = vld [vmem:[%s172 + $0x800] sm:$0xff]
        %v431 = vld [vmem:[%s172 + $0x808] sm:$0xff]
        %v432 = vld [vmem:[%s172 + $0x810] sm:$0xff]
        %v433 = vld [vmem:[%s172 + $0x818] sm:$0xff]
        %v434 = vld [vmem:[%s172 + $0x820] sm:$0xff]
        %v435 = vld [vmem:[%s172 + $0x828] sm:$0xff]
        %v436 = vld [vmem:[%s172 + $0x830] sm:$0xff]
        %v437 = vld [vmem:[%s172 + $0x838] sm:$0xff]
        %v438 = vld [vmem:[%s172 + $0x840] sm:$0xff]
        %v439 = vld [vmem:[%s172 + $0x848] sm:$0xff]
        %v440 = vld [vmem:[%s172 + $0x850] sm:$0xff]
        %v441 = vld [vmem:[%s172 + $0x858] sm:$0xff]
        %v442 = vld [vmem:[%s172 + $0x860] sm:$0xff]
        %v443 = vld [vmem:[%s172 + $0x868] sm:$0xff]
        %v444 = vld [vmem:[%s172 + $0x870] sm:$0xff]
        %v445 = vld [vmem:[%s172 + $0x878] sm:$0xff]
        %v446 = vld [vmem:[%s172 + $0x880] sm:$0xff]
        %v447 = vld [vmem:[%s172 + $0x888] sm:$0xff]
        %v448 = vld [vmem:[%s172 + $0x890] sm:$0xff]
        %v449 = vld [vmem:[%s172 + $0x898] sm:$0xff]
        %v450 = vld [vmem:[%s172 + $0x8a0] sm:$0xff]
        %v451 = vld [vmem:[%s172 + $0x8a8] sm:$0xff]
        %v452 = vld [vmem:[%s172 + $0x8b0] sm:$0xff]
        %v453 = vld [vmem:[%s172 + $0x8b8] sm:$0xff]
        %v454 = vld [vmem:[%s172 + $0x8c0] sm:$0xff]
        %v455 = vld [vmem:[%s172 + $0x8c8] sm:$0xff]
        %v456 = vld [vmem:[%s172 + $0x8d0] sm:$0xff]
        %v457 = vld [vmem:[%s172 + $0x8d8] sm:$0xff]
        %v458 = vld [vmem:[%s172 + $0x8e0] sm:$0xff]
        %v459 = vld [vmem:[%s172 + $0x8e8] sm:$0xff]
        %v460 = vld [vmem:[%s172 + $0x8f0] sm:$0xff]
        %v461 = vld [vmem:[%s172 + $0x8f8] sm:$0xff]
        %v462 = vld [vmem:[%s172 + $0x900] sm:$0xff]
        %v463 = vld [vmem:[%s172 + $0x908] sm:$0xff]
        %v464 = vld [vmem:[%s172 + $0x910] sm:$0xff]
        %v465 = vld [vmem:[%s172 + $0x918] sm:$0xff]
        %v466 = vld [vmem:[%s172 + $0x920] sm:$0xff]
        %v467 = vld [vmem:[%s172 + $0x928] sm:$0xff]
        %v468 = vld [vmem:[%s172 + $0x930] sm:$0xff]
        %v469 = vld [vmem:[%s172 + $0x938] sm:$0xff]
        %v470 = vld [vmem:[%s172 + $0x940] sm:$0xff]
        %v471 = vld [vmem:[%s172 + $0x948] sm:$0xff]
        %v472 = vld [vmem:[%s172 + $0x950] sm:$0xff]
        %v473 = vld [vmem:[%s172 + $0x958] sm:$0xff]
        %v474 = vld [vmem:[%s172 + $0x960] sm:$0xff]
        %v475 = vld [vmem:[%s172 + $0x968] sm:$0xff]
        %v476 = vld [vmem:[%s172 + $0x970] sm:$0xff]
        %v477 = vld [vmem:[%s172 + $0x978] sm:$0xff]
        %v478 = vld [vmem:[%s172 + $0x980] sm:$0xff]
        %v479 = vld [vmem:[%s172 + $0x988] sm:$0xff]
        %v480 = vld [vmem:[%s172 + $0x990] sm:$0xff]
        %v481 = vld [vmem:[%s172 + $0x998] sm:$0xff]
        %v482 = vld [vmem:[%s172 + $0x9a0] sm:$0xff]
        %v483 = vld [vmem:[%s172 + $0x9a8] sm:$0xff]
        %v484 = vld [vmem:[%s172 + $0x9b0] sm:$0xff]
        %v485 = vld [vmem:[%s172 + $0x9b8] sm:$0xff]
        %v486 = vld [vmem:[%s172 + $0x9c0] sm:$0xff]
        %v487 = vld [vmem:[%s172 + $0x9c8] sm:$0xff]
        %v488 = vld [vmem:[%s172 + $0x9d0] sm:$0xff]
        %v489 = vld [vmem:[%s172 + $0x9d8] sm:$0xff]
        %v490 = vld [vmem:[%s172 + $0x9e0] sm:$0xff]
        %v491 = vld [vmem:[%s172 + $0x9e8] sm:$0xff]
        %v492 = vld [vmem:[%s172 + $0x9f0] sm:$0xff]
        %v493 = vld [vmem:[%s172 + $0x9f8] sm:$0xff]
        %v494 = vld [vmem:[%s172 + $0xa00] sm:$0xff]
        %v495 = vld [vmem:[%s172 + $0xa08] sm:$0xff]
        %v496 = vld [vmem:[%s172 + $0xa10] sm:$0xff]
        %v497 = vld [vmem:[%s172 + $0xa18] sm:$0xff]
        %v498 = vld [vmem:[%s172 + $0xa20] sm:$0xff]
        %v499 = vld [vmem:[%s172 + $0xa28] sm:$0xff]
        %v500 = vld [vmem:[%s172 + $0xa30] sm:$0xff]
        %v501 = vld [vmem:[%s172 + $0xa38] sm:$0xff]
        %v502 = vld [vmem:[%s172 + $0xa40] sm:$0xff]
        %v503 = vld [vmem:[%s172 + $0xa48] sm:$0xff]
        %v504 = vld [vmem:[%s172 + $0xa50] sm:$0xff]
        %v505 = vld [vmem:[%s172 + $0xa58] sm:$0xff]
        %v506 = vld [vmem:[%s172 + $0xa60] sm:$0xff]
        %v507 = vld [vmem:[%s172 + $0xa68] sm:$0xff]
        %v508 = vld [vmem:[%s172 + $0xa70] sm:$0xff]
        %v509 = vld [vmem:[%s172 + $0xa78] sm:$0xff]
        %v510 = vld [vmem:[%s172 + $0xa80] sm:$0xff]
        %v511 = vld [vmem:[%s172 + $0xa88] sm:$0xff]
        %v512 = vld [vmem:[%s172 + $0xa90] sm:$0xff]
        %v513 = vld [vmem:[%s172 + $0xa98] sm:$0xff]
        %v514 = vld [vmem:[%s172 + $0xaa0] sm:$0xff]
        %v515 = vld [vmem:[%s172 + $0xaa8] sm:$0xff]
        %v516 = vld [vmem:[%s172 + $0xab0] sm:$0xff]
        %v517 = vld [vmem:[%s172 + $0xab8] sm:$0xff]
        %v518 = vld [vmem:[%s172 + $0xac0] sm:$0xff]
        %v519 = vld [vmem:[%s172 + $0xac8] sm:$0xff]
        %v520 = vld [vmem:[%s172 + $0xad0] sm:$0xff]
        %v521 = vld [vmem:[%s172 + $0xad8] sm:$0xff]
        %v522 = vld [vmem:[%s172 + $0xae0] sm:$0xff]
        %v523 = vld [vmem:[%s172 + $0xae8] sm:$0xff]
        %v524 = vld [vmem:[%s172 + $0xaf0] sm:$0xff]
        %v525 = vld [vmem:[%s172 + $0xaf8] sm:$0xff]
        %v526 = vld [vmem:[%s172 + $0xb00] sm:$0xff]
        %v527 = vld [vmem:[%s172 + $0xb08] sm:$0xff]
        %v528 = vld [vmem:[%s172 + $0xb10] sm:$0xff]
        %v529 = vld [vmem:[%s172 + $0xb18] sm:$0xff]
        %v530 = vld [vmem:[%s172 + $0xb20] sm:$0xff]
        %v531 = vld [vmem:[%s172 + $0xb28] sm:$0xff]
        %v532 = vld [vmem:[%s172 + $0xb30] sm:$0xff]
        %v533 = vld [vmem:[%s172 + $0xb38] sm:$0xff]
        %v534 = vld [vmem:[%s172 + $0xb40] sm:$0xff]
        %v535 = vld [vmem:[%s172 + $0xb48] sm:$0xff]
        %v536 = vld [vmem:[%s172 + $0xb50] sm:$0xff]
        %v537 = vld [vmem:[%s172 + $0xb58] sm:$0xff]
        %v538 = vld [vmem:[%s172 + $0xb60] sm:$0xff]
        %v539 = vld [vmem:[%s172 + $0xb68] sm:$0xff]
        %v540 = vld [vmem:[%s172 + $0xb70] sm:$0xff]
        %v541 = vld [vmem:[%s172 + $0xb78] sm:$0xff]
        %v542 = vld [vmem:[%s172 + $0xb80] sm:$0xff]
        %v543 = vld [vmem:[%s172 + $0xb88] sm:$0xff]
        %v544 = vld [vmem:[%s172 + $0xb90] sm:$0xff]
        %v545 = vld [vmem:[%s172 + $0xb98] sm:$0xff]
        %v546 = vld [vmem:[%s172 + $0xba0] sm:$0xff]
        %v547 = vld [vmem:[%s172 + $0xba8] sm:$0xff]
        %v548 = vld [vmem:[%s172 + $0xbb0] sm:$0xff]
        %v549 = vld [vmem:[%s172 + $0xbb8] sm:$0xff]
        %v550 = vld [vmem:[%s172 + $0xbc0] sm:$0xff]
        %v551 = vld [vmem:[%s172 + $0xbc8] sm:$0xff]
        %v552 = vld [vmem:[%s172 + $0xbd0] sm:$0xff]
        %v553 = vld [vmem:[%s172 + $0xbd8] sm:$0xff]
        %v554 = vld [vmem:[%s172 + $0xbe0] sm:$0xff]
        %v555 = vld [vmem:[%s172 + $0xbe8] sm:$0xff]
        %v556 = vld [vmem:[%s172 + $0xbf0] sm:$0xff]
        %v557 = vld [vmem:[%s172 + $0xbf8] sm:$0xff]
        %v558 = vld [vmem:[%s172 + $0xc00] sm:$0xff]
        %v559 = vld [vmem:[%s172 + $0xc08] sm:$0xff]
        %v560 = vld [vmem:[%s172 + $0xc10] sm:$0xff]
        %v561 = vld [vmem:[%s172 + $0xc18] sm:$0xff]
        %v562 = vld [vmem:[%s172 + $0xc20] sm:$0xff]
        %v563 = vld [vmem:[%s172 + $0xc28] sm:$0xff]
        %v564 = vld [vmem:[%s172 + $0xc30] sm:$0xff]
        %v565 = vld [vmem:[%s172 + $0xc38] sm:$0xff]
        %v566 = vld [vmem:[%s172 + $0xc40] sm:$0xff]
        %v567 = vld [vmem:[%s172 + $0xc48] sm:$0xff]
        %v568 = vld [vmem:[%s172 + $0xc50] sm:$0xff]
        %v569 = vld [vmem:[%s172 + $0xc58] sm:$0xff]
        %v570 = vld [vmem:[%s172 + $0xc60] sm:$0xff]
        %v571 = vld [vmem:[%s172 + $0xc68] sm:$0xff]
        %v572 = vld [vmem:[%s172 + $0xc70] sm:$0xff]
        %v573 = vld [vmem:[%s172 + $0xc78] sm:$0xff]
        %v574 = vld [vmem:[%s172 + $0xc80] sm:$0xff]
        %v575 = vld [vmem:[%s172 + $0xc88] sm:$0xff]
        %v576 = vld [vmem:[%s172 + $0xc90] sm:$0xff]
        %v577 = vld [vmem:[%s172 + $0xc98] sm:$0xff]
        %v578 = vld [vmem:[%s172 + $0xca0] sm:$0xff]
        %v579 = vld [vmem:[%s172 + $0xca8] sm:$0xff]
        %v580 = vld [vmem:[%s172 + $0xcb0] sm:$0xff]
        %v581 = vld [vmem:[%s172 + $0xcb8] sm:$0xff]
        %v582 = vld [vmem:[%s172 + $0xcc0] sm:$0xff]
        %v583 = vld [vmem:[%s172 + $0xcc8] sm:$0xff]
        %v584 = vld [vmem:[%s172 + $0xcd0] sm:$0xff]
        %v585 = vld [vmem:[%s172 + $0xcd8] sm:$0xff]
        %v586 = vld [vmem:[%s172 + $0xce0] sm:$0xff]
        %v587 = vld [vmem:[%s172 + $0xce8] sm:$0xff]
        %v588 = vld [vmem:[%s172 + $0xcf0] sm:$0xff]
        %v589 = vld [vmem:[%s172 + $0xcf8] sm:$0xff]
        %v590 = vld [vmem:[%s172 + $0xd00] sm:$0xff]
        %v591 = vld [vmem:[%s172 + $0xd08] sm:$0xff]
        %v592 = vld [vmem:[%s172 + $0xd10] sm:$0xff]
        %v593 = vld [vmem:[%s172 + $0xd18] sm:$0xff]
        %v594 = vld [vmem:[%s172 + $0xd20] sm:$0xff]
        %v595 = vld [vmem:[%s172 + $0xd28] sm:$0xff]
        %v596 = vld [vmem:[%s172 + $0xd30] sm:$0xff]
        %v597 = vld [vmem:[%s172 + $0xd38] sm:$0xff]
        %v598 = vld [vmem:[%s172 + $0xd40] sm:$0xff]
        %v599 = vld [vmem:[%s172 + $0xd48] sm:$0xff]
        %v600 = vld [vmem:[%s172 + $0xd50] sm:$0xff]
        %v601 = vld [vmem:[%s172 + $0xd58] sm:$0xff]
        %v602 = vld [vmem:[%s172 + $0xd60] sm:$0xff]
        %v603 = vld [vmem:[%s172 + $0xd68] sm:$0xff]
        %v604 = vld [vmem:[%s172 + $0xd70] sm:$0xff]
        %v605 = vld [vmem:[%s172 + $0xd78] sm:$0xff]
        %v606 = vld [vmem:[%s172 + $0xd80] sm:$0xff]
        %v607 = vld [vmem:[%s172 + $0xd88] sm:$0xff]
        %v608 = vld [vmem:[%s172 + $0xd90] sm:$0xff]
        %v609 = vld [vmem:[%s172 + $0xd98] sm:$0xff]
        %v610 = vld [vmem:[%s172 + $0xda0] sm:$0xff]
        %v611 = vld [vmem:[%s172 + $0xda8] sm:$0xff]
        %v612 = vld [vmem:[%s172 + $0xdb0] sm:$0xff]
        %v613 = vld [vmem:[%s172 + $0xdb8] sm:$0xff]
        %v614 = vld [vmem:[%s172 + $0xdc0] sm:$0xff]
        %v615 = vld [vmem:[%s172 + $0xdc8] sm:$0xff]
        %v616 = vld [vmem:[%s172 + $0xdd0] sm:$0xff]
        %v617 = vld [vmem:[%s172 + $0xdd8] sm:$0xff]
        %v618 = vld [vmem:[%s172 + $0xde0] sm:$0xff]
        %v619 = vld [vmem:[%s172 + $0xde8] sm:$0xff]
        %v620 = vld [vmem:[%s172 + $0xdf0] sm:$0xff]
        %v621 = vld [vmem:[%s172 + $0xdf8] sm:$0xff]
        %v622 = vld [vmem:[%s172 + $0xe00] sm:$0xff]
        %v623 = vld [vmem:[%s172 + $0xe08] sm:$0xff]
        %v624 = vld [vmem:[%s172 + $0xe10] sm:$0xff]
        %v625 = vld [vmem:[%s172 + $0xe18] sm:$0xff]
        %v626 = vld [vmem:[%s172 + $0xe20] sm:$0xff]
        %v627 = vld [vmem:[%s172 + $0xe28] sm:$0xff]
        %v628 = vld [vmem:[%s172 + $0xe30] sm:$0xff]
        %v629 = vld [vmem:[%s172 + $0xe38] sm:$0xff]
        %v630 = vld [vmem:[%s172 + $0xe40] sm:$0xff]
        %v631 = vld [vmem:[%s172 + $0xe48] sm:$0xff]
        %v632 = vld [vmem:[%s172 + $0xe50] sm:$0xff]
        %v633 = vld [vmem:[%s172 + $0xe58] sm:$0xff]
        %v634 = vld [vmem:[%s172 + $0xe60] sm:$0xff]
        %v635 = vld [vmem:[%s172 + $0xe68] sm:$0xff]
        %v636 = vld [vmem:[%s172 + $0xe70] sm:$0xff]
        %v637 = vld [vmem:[%s172 + $0xe78] sm:$0xff]
        %v638 = vld [vmem:[%s172 + $0xe80] sm:$0xff]
        %v639 = vld [vmem:[%s172 + $0xe88] sm:$0xff]
        %v640 = vld [vmem:[%s172 + $0xe90] sm:$0xff]
        %v641 = vld [vmem:[%s172 + $0xe98] sm:$0xff]
        %v642 = vld [vmem:[%s172 + $0xea0] sm:$0xff]
        %v643 = vld [vmem:[%s172 + $0xea8] sm:$0xff]
        %v644 = vld [vmem:[%s172 + $0xeb0] sm:$0xff]
        %v645 = vld [vmem:[%s172 + $0xeb8] sm:$0xff]
        %v646 = vld [vmem:[%s172 + $0xec0] sm:$0xff]
        %v647 = vld [vmem:[%s172 + $0xec8] sm:$0xff]
        %v648 = vld [vmem:[%s172 + $0xed0] sm:$0xff]
        %v649 = vld [vmem:[%s172 + $0xed8] sm:$0xff]
        %v650 = vld [vmem:[%s172 + $0xee0] sm:$0xff]
        %v651 = vld [vmem:[%s172 + $0xee8] sm:$0xff]
        %v652 = vld [vmem:[%s172 + $0xef0] sm:$0xff]
        %v653 = vld [vmem:[%s172 + $0xef8] sm:$0xff]
        %v654 = vld [vmem:[%s172 + $0xf00] sm:$0xff]
        %v655 = vld [vmem:[%s172 + $0xf08] sm:$0xff]
        %v656 = vld [vmem:[%s172 + $0xf10] sm:$0xff]
        %v657 = vld [vmem:[%s172 + $0xf18] sm:$0xff]
        %v658 = vld [vmem:[%s172 + $0xf20] sm:$0xff]
        %v659 = vld [vmem:[%s172 + $0xf28] sm:$0xff]
        %v660 = vld [vmem:[%s172 + $0xf30] sm:$0xff]
        %v661 = vld [vmem:[%s172 + $0xf38] sm:$0xff]
        %v662 = vld [vmem:[%s172 + $0xf40] sm:$0xff]
        %v663 = vld [vmem:[%s172 + $0xf48] sm:$0xff]
        %v664 = vld [vmem:[%s172 + $0xf50] sm:$0xff]
        %v665 = vld [vmem:[%s172 + $0xf58] sm:$0xff]
        %v666 = vld [vmem:[%s172 + $0xf60] sm:$0xff]
        %v667 = vld [vmem:[%s172 + $0xf68] sm:$0xff]
        %v668 = vld [vmem:[%s172 + $0xf70] sm:$0xff]
        %v669 = vld [vmem:[%s172 + $0xf78] sm:$0xff]
        %v670 = vld [vmem:[%s172 + $0xf80] sm:$0xff]
        %v671 = vld [vmem:[%s172 + $0xf88] sm:$0xff]
        %v672 = vld [vmem:[%s172 + $0xf90] sm:$0xff]
        %v673 = vld [vmem:[%s172 + $0xf98] sm:$0xff]
        %v674 = vld [vmem:[%s172 + $0xfa0] sm:$0xff]
        %v675 = vld [vmem:[%s172 + $0xfa8] sm:$0xff]
        %v676 = vld [vmem:[%s172 + $0xfb0] sm:$0xff]
        %v677 = vld [vmem:[%s172 + $0xfb8] sm:$0xff]
        %v678 = vld [vmem:[%s172 + $0xfc0] sm:$0xff]
        %v679 = vld [vmem:[%s172 + $0xfc8] sm:$0xff]
        %v680 = vld [vmem:[%s172 + $0xfd0] sm:$0xff]
        %v681 = vld [vmem:[%s172 + $0xfd8] sm:$0xff]
        %v682 = vld [vmem:[%s172 + $0xfe0] sm:$0xff]
        %v683 = vld [vmem:[%s172 + $0xfe8] sm:$0xff]
        %v684 = vld [vmem:[%s172 + $0xff0] sm:$0xff]
        %v685 = vld [vmem:[%s172 + $0xff8] sm:$0xff]
        %v686 = vld [vmem:[%s1] sm:$0xff]
        %v687 = vld [vmem:[%s1 + $0x8] sm:$0xff]
        %v688 = vld [vmem:[%s1 + $0x10] sm:$0xff]
        %v689 = vld [vmem:[%s1 + $0x18] sm:$0xff]
        %v690 = vld [vmem:[%s1 + $0x20] sm:$0x3]
        %v691 = vld [vmem:[%s1 + $0x28] sm:$0x3]
        %v692 = vld [vmem:[%s1 + $0x30] sm:$0x3]
        %v693 = vld [vmem:[%s1 + $0x38] sm:$0x3]
        %v694 = vld [vmem:[%s2] sm:$0xff]
        %v695 = vld [vmem:[%s2 + $0x8] sm:$0x3]
        %697 = vset.pattern.permute.xlu0 0
        %698 = vperm.xlu0 %697, %v694
        %v699 = vpop.permute.xlu0 %698
        %702 = vset.pattern.permute.xlu0 0
        %703 = vperm.xlu0 %702, %v695
        %v704 = vpop.permute.xlu0 %703
        %706 = vmatpush.msra.mxu0 %v189
        %707 = vmatpush.msra.mxu0 %v188
        %708 = vmatpush.msra.mxu0 %v187
        %709 = vmatpush.msra.mxu0 %v186
        %710 = vmatpush.msra.mxu0 %v185
        %711 = vmatpush.msra.mxu0 %v184
        %712 = vmatpush.msra.mxu0 %v183
        %713 = vmatpush.msra.mxu0 %v182
        %714 = vmatpush.msra.mxu0 %v181
        %715 = vmatpush.msra.mxu0 %v180
        %716 = vmatpush.msra.mxu0 %v179
        %717 = vmatpush.msra.mxu0 %v178
        %718 = vmatpush.msra.mxu0 %v177
        %719 = vmatpush.msra.mxu0 %v176
        %720 = vmatpush.msra.mxu0 %v175
        %721 = vmatpush.msra.mxu0 %v174
        %722 = vmatmul.f32.gmra.mxu0 %v686
        %v723 = vpop.f32.mrf.mxu0
        %v724 = vadd.f32 %v699, %v723
        %725 = vmatmul.f32.gmra.mxu0 %v690
        %v726 = vpop.f32.mrf.mxu0
        %v727 = vadd.f32 %v704, %v726
        %728 = vdwg.mxu0
        %729 = vmatpush.msra.mxu0 %v205
        %730 = vmatpush.msra.mxu0 %v204
        %731 = vmatpush.msra.mxu0 %v203
        %732 = vmatpush.msra.mxu0 %v202
        %733 = vmatpush.msra.mxu0 %v201
        %734 = vmatpush.msra.mxu0 %v200
        %735 = vmatpush.msra.mxu0 %v199
        %736 = vmatpush.msra.mxu0 %v198
        %737 = vmatpush.msra.mxu0 %v197
        %738 = vmatpush.msra.mxu0 %v196
        %739 = vmatpush.msra.mxu0 %v195
        %740 = vmatpush.msra.mxu0 %v194
        %741 = vmatpush.msra.mxu0 %v193
        %742 = vmatpush.msra.mxu0 %v192
        %743 = vmatpush.msra.mxu0 %v191
        %744 = vmatpush.msra.mxu0 %v190
        %745 = vmatmul.f32.gmra.mxu0 %v687
        %v746 = vpop.f32.mrf.mxu0
        %v747 = vadd.f32 %v724, %v746
        %748 = vmatmul.f32.gmra.mxu0 %v691
        %v749 = vpop.f32.mrf.mxu0
        %v750 = vadd.f32 %v727, %v749
        %751 = vdwg.mxu0
        %752 = vmatpush.msra.mxu0 %v221
        %753 = vmatpush.msra.mxu0 %v220
        %754 = vmatpush.msra.mxu0 %v219
        %755 = vmatpush.msra.mxu0 %v218
        %756 = vmatpush.msra.mxu0 %v217
        %757 = vmatpush.msra.mxu0 %v216
        %758 = vmatpush.msra.mxu0 %v215
        %759 = vmatpush.msra.mxu0 %v214
        %760 = vmatpush.msra.mxu0 %v213
        %761 = vmatpush.msra.mxu0 %v212
        %762 = vmatpush.msra.mxu0 %v211
        %763 = vmatpush.msra.mxu0 %v210
        %764 = vmatpush.msra.mxu0 %v209
        %765 = vmatpush.msra.mxu0 %v208
        %766 = vmatpush.msra.mxu0 %v207
        %767 = vmatpush.msra.mxu0 %v206
        %768 = vmatmul.f32.gmra.mxu0 %v688
        %v769 = vpop.f32.mrf.mxu0
        %v770 = vadd.f32 %v747, %v769
        %771 = vmatmul.f32.gmra.mxu0 %v692
        %v772 = vpop.f32.mrf.mxu0
        %v773 = vadd.f32 %v750, %v772
        %774 = vdwg.mxu0
        %775 = vmatpush.msra.mxu0 %v237
        %776 = vmatpush.msra.mxu0 %v236
        %777 = vmatpush.msra.mxu0 %v235
        %778 = vmatpush.msra.mxu0 %v234
        %779 = vmatpush.msra.mxu0 %v233
        %780 = vmatpush.msra.mxu0 %v232
        %781 = vmatpush.msra.mxu0 %v231
        %782 = vmatpush.msra.mxu0 %v230
        %783 = vmatpush.msra.mxu0 %v229
        %784 = vmatpush.msra.mxu0 %v228
        %785 = vmatpush.msra.mxu0 %v227
        %786 = vmatpush.msra.mxu0 %v226
        %787 = vmatpush.msra.mxu0 %v225
        %788 = vmatpush.msra.mxu0 %v224
        %789 = vmatpush.msra.mxu0 %v223
        %790 = vmatpush.msra.mxu0 %v222
        %791 = vmatmul.f32.gmra.mxu0 %v689
        %v792 = vpop.f32.mrf.mxu0
        %v793 = vadd.f32 %v770, %v792
        %794 = vmatmul.f32.gmra.mxu0 %v693
        %v795 = vpop.f32.mrf.mxu0
        %v796 = vadd.f32 %v773, %v795
        %797 = vdwg.mxu0
        %798 = vmatpush.msra.mxu0 %v253
        %799 = vmatpush.msra.mxu0 %v252
        %800 = vmatpush.msra.mxu0 %v251
        %801 = vmatpush.msra.mxu0 %v250
        %802 = vmatpush.msra.mxu0 %v249
        %803 = vmatpush.msra.mxu0 %v248
        %804 = vmatpush.msra.mxu0 %v247
        %805 = vmatpush.msra.mxu0 %v246
        %806 = vmatpush.msra.mxu0 %v245
        %807 = vmatpush.msra.mxu0 %v244
        %808 = vmatpush.msra.mxu0 %v243
        %809 = vmatpush.msra.mxu0 %v242
        %810 = vmatpush.msra.mxu0 %v241
        %811 = vmatpush.msra.mxu0 %v240
        %812 = vmatpush.msra.mxu0 %v239
        %813 = vmatpush.msra.mxu0 %v238
        %814 = vmatmul.f32.gmra.mxu0 %v686
        %v815 = vpop.f32.mrf.mxu0
        %v816 = vadd.f32 %v699, %v815
        %817 = vmatmul.f32.gmra.mxu0 %v690
        %v818 = vpop.f32.mrf.mxu0
        %v819 = vadd.f32 %v704, %v818
        %820 = vdwg.mxu0
        %821 = vmatpush.msra.mxu0 %v269
        %822 = vmatpush.msra.mxu0 %v268
        %823 = vmatpush.msra.mxu0 %v267
        %824 = vmatpush.msra.mxu0 %v266
        %825 = vmatpush.msra.mxu0 %v265
        %826 = vmatpush.msra.mxu0 %v264
        %827 = vmatpush.msra.mxu0 %v263
        %828 = vmatpush.msra.mxu0 %v262
        %829 = vmatpush.msra.mxu0 %v261
        %830 = vmatpush.msra.mxu0 %v260
        %831 = vmatpush.msra.mxu0 %v259
        %832 = vmatpush.msra.mxu0 %v258
        %833 = vmatpush.msra.mxu0 %v257
        %834 = vmatpush.msra.mxu0 %v256
        %835 = vmatpush.msra.mxu0 %v255
        %836 = vmatpush.msra.mxu0 %v254
        %837 = vmatmul.f32.gmra.mxu0 %v687
        %v838 = vpop.f32.mrf.mxu0
        %v839 = vadd.f32 %v816, %v838
        %840 = vmatmul.f32.gmra.mxu0 %v691
        %v841 = vpop.f32.mrf.mxu0
        %v842 = vadd.f32 %v819, %v841
        %843 = vdwg.mxu0
        %844 = vmatpush.msra.mxu0 %v285
        %845 = vmatpush.msra.mxu0 %v284
        %846 = vmatpush.msra.mxu0 %v283
        %847 = vmatpush.msra.mxu0 %v282
        %848 = vmatpush.msra.mxu0 %v281
        %849 = vmatpush.msra.mxu0 %v280
        %850 = vmatpush.msra.mxu0 %v279
        %851 = vmatpush.msra.mxu0 %v278
        %852 = vmatpush.msra.mxu0 %v277
        %853 = vmatpush.msra.mxu0 %v276
        %854 = vmatpush.msra.mxu0 %v275
        %855 = vmatpush.msra.mxu0 %v274
        %856 = vmatpush.msra.mxu0 %v273
        %857 = vmatpush.msra.mxu0 %v272
        %858 = vmatpush.msra.mxu0 %v271
        %859 = vmatpush.msra.mxu0 %v270
        %860 = vmatmul.f32.gmra.mxu0 %v688
        %v861 = vpop.f32.mrf.mxu0
        %v862 = vadd.f32 %v839, %v861
        %863 = vmatmul.f32.gmra.mxu0 %v692
        %v864 = vpop.f32.mrf.mxu0
        %v865 = vadd.f32 %v842, %v864
        %866 = vdwg.mxu0
        %867 = vmatpush.msra.mxu0 %v301
        %868 = vmatpush.msra.mxu0 %v300
        %869 = vmatpush.msra.mxu0 %v299
        %870 = vmatpush.msra.mxu0 %v298
        %871 = vmatpush.msra.mxu0 %v297
        %872 = vmatpush.msra.mxu0 %v296
        %873 = vmatpush.msra.mxu0 %v295
        %874 = vmatpush.msra.mxu0 %v294
        %875 = vmatpush.msra.mxu0 %v293
        %876 = vmatpush.msra.mxu0 %v292
        %877 = vmatpush.msra.mxu0 %v291
        %878 = vmatpush.msra.mxu0 %v290
        %879 = vmatpush.msra.mxu0 %v289
        %880 = vmatpush.msra.mxu0 %v288
        %881 = vmatpush.msra.mxu0 %v287
        %882 = vmatpush.msra.mxu0 %v286
        %883 = vmatmul.f32.gmra.mxu0 %v689
        %v884 = vpop.f32.mrf.mxu0
        %v885 = vadd.f32 %v862, %v884
        %886 = vmatmul.f32.gmra.mxu0 %v693
        %v887 = vpop.f32.mrf.mxu0
        %v888 = vadd.f32 %v865, %v887
        %889 = vdwg.mxu0
        %890 = vmatpush.msra.mxu0 %v317
        %891 = vmatpush.msra.mxu0 %v316
        %892 = vmatpush.msra.mxu0 %v315
        %893 = vmatpush.msra.mxu0 %v314
        %894 = vmatpush.msra.mxu0 %v313
        %895 = vmatpush.msra.mxu0 %v312
        %896 = vmatpush.msra.mxu0 %v311
        %897 = vmatpush.msra.mxu0 %v310
        %898 = vmatpush.msra.mxu0 %v309
        %899 = vmatpush.msra.mxu0 %v308
        %900 = vmatpush.msra.mxu0 %v307
        %901 = vmatpush.msra.mxu0 %v306
        %902 = vmatpush.msra.mxu0 %v305
        %903 = vmatpush.msra.mxu0 %v304
        %904 = vmatpush.msra.mxu0 %v303
        %905 = vmatpush.msra.mxu0 %v302
        %906 = vmatmul.f32.gmra.mxu0 %v686
        %v907 = vpop.f32.mrf.mxu0
        %v908 = vadd.f32 %v699, %v907
        %909 = vmatmul.f32.gmra.mxu0 %v690
        %v910 = vpop.f32.mrf.mxu0
        %v911 = vadd.f32 %v704, %v910
        %912 = vdwg.mxu0
        %913 = vmatpush.msra.mxu0 %v333
        %914 = vmatpush.msra.mxu0 %v332
        %915 = vmatpush.msra.mxu0 %v331
        %916 = vmatpush.msra.mxu0 %v330
        %917 = vmatpush.msra.mxu0 %v329
        %918 = vmatpush.msra.mxu0 %v328
        %919 = vmatpush.msra.mxu0 %v327
        %920 = vmatpush.msra.mxu0 %v326
        %921 = vmatpush.msra.mxu0 %v325
        %922 = vmatpush.msra.mxu0 %v324
        %923 = vmatpush.msra.mxu0 %v323
        %924 = vmatpush.msra.mxu0 %v322
        %925 = vmatpush.msra.mxu0 %v321
        %926 = vmatpush.msra.mxu0 %v320
        %927 = vmatpush.msra.mxu0 %v319
        %928 = vmatpush.msra.mxu0 %v318
        %929 = vmatmul.f32.gmra.mxu0 %v687
        %v930 = vpop.f32.mrf.mxu0
        %v931 = vadd.f32 %v908, %v930
        %932 = vmatmul.f32.gmra.mxu0 %v691
        %v933 = vpop.f32.mrf.mxu0
        %v934 = vadd.f32 %v911, %v933
        %935 = vdwg.mxu0
        %936 = vmatpush.msra.mxu0 %v349
        %937 = vmatpush.msra.mxu0 %v348
        %938 = vmatpush.msra.mxu0 %v347
        %939 = vmatpush.msra.mxu0 %v346
        %940 = vmatpush.msra.mxu0 %v345
        %941 = vmatpush.msra.mxu0 %v344
        %942 = vmatpush.msra.mxu0 %v343
        %943 = vmatpush.msra.mxu0 %v342
        %944 = vmatpush.msra.mxu0 %v341
        %945 = vmatpush.msra.mxu0 %v340
        %946 = vmatpush.msra.mxu0 %v339
        %947 = vmatpush.msra.mxu0 %v338
        %948 = vmatpush.msra.mxu0 %v337
        %949 = vmatpush.msra.mxu0 %v336
        %950 = vmatpush.msra.mxu0 %v335
        %951 = vmatpush.msra.mxu0 %v334
        %952 = vmatmul.f32.gmra.mxu0 %v688
        %v953 = vpop.f32.mrf.mxu0
        %v954 = vadd.f32 %v931, %v953
        %955 = vmatmul.f32.gmra.mxu0 %v692
        %v956 = vpop.f32.mrf.mxu0
        %v957 = vadd.f32 %v934, %v956
        %958 = vdwg.mxu0
        %959 = vmatpush.msra.mxu0 %v365
        %960 = vmatpush.msra.mxu0 %v364
        %961 = vmatpush.msra.mxu0 %v363
        %962 = vmatpush.msra.mxu0 %v362
        %963 = vmatpush.msra.mxu0 %v361
        %964 = vmatpush.msra.mxu0 %v360
        %965 = vmatpush.msra.mxu0 %v359
        %966 = vmatpush.msra.mxu0 %v358
        %967 = vmatpush.msra.mxu0 %v357
        %968 = vmatpush.msra.mxu0 %v356
        %969 = vmatpush.msra.mxu0 %v355
        %970 = vmatpush.msra.mxu0 %v354
        %971 = vmatpush.msra.mxu0 %v353
        %972 = vmatpush.msra.mxu0 %v352
        %973 = vmatpush.msra.mxu0 %v351
        %974 = vmatpush.msra.mxu0 %v350
        %975 = vmatmul.f32.gmra.mxu0 %v689
        %v976 = vpop.f32.mrf.mxu0
        %v977 = vadd.f32 %v954, %v976
        %978 = vmatmul.f32.gmra.mxu0 %v693
        %v979 = vpop.f32.mrf.mxu0
        %v980 = vadd.f32 %v957, %v979
        %981 = vdwg.mxu0
        %982 = vmatpush.msra.mxu0 %v381
        %983 = vmatpush.msra.mxu0 %v380
        %984 = vmatpush.msra.mxu0 %v379
        %985 = vmatpush.msra.mxu0 %v378
        %986 = vmatpush.msra.mxu0 %v377
        %987 = vmatpush.msra.mxu0 %v376
        %988 = vmatpush.msra.mxu0 %v375
        %989 = vmatpush.msra.mxu0 %v374
        %990 = vmatpush.msra.mxu0 %v373
        %991 = vmatpush.msra.mxu0 %v372
        %992 = vmatpush.msra.mxu0 %v371
        %993 = vmatpush.msra.mxu0 %v370
        %994 = vmatpush.msra.mxu0 %v369
        %995 = vmatpush.msra.mxu0 %v368
        %996 = vmatpush.msra.mxu0 %v367
        %997 = vmatpush.msra.mxu0 %v366
        %998 = vmatmul.f32.gmra.mxu0 %v686
        %v999 = vpop.f32.mrf.mxu0
        %v1000 = vadd.f32 %v699, %v999
        %1001 = vmatmul.f32.gmra.mxu0 %v690
        %v1002 = vpop.f32.mrf.mxu0
        %v1003 = vadd.f32 %v704, %v1002
        %1004 = vdwg.mxu0
        %1005 = vmatpush.msra.mxu0 %v397
        %1006 = vmatpush.msra.mxu0 %v396
        %1007 = vmatpush.msra.mxu0 %v395
        %1008 = vmatpush.msra.mxu0 %v394
        %1009 = vmatpush.msra.mxu0 %v393
        %1010 = vmatpush.msra.mxu0 %v392
        %1011 = vmatpush.msra.mxu0 %v391
        %1012 = vmatpush.msra.mxu0 %v390
        %1013 = vmatpush.msra.mxu0 %v389
        %1014 = vmatpush.msra.mxu0 %v388
        %1015 = vmatpush.msra.mxu0 %v387
        %1016 = vmatpush.msra.mxu0 %v386
        %1017 = vmatpush.msra.mxu0 %v385
        %1018 = vmatpush.msra.mxu0 %v384
        %1019 = vmatpush.msra.mxu0 %v383
        %1020 = vmatpush.msra.mxu0 %v382
        %1021 = vmatmul.f32.gmra.mxu0 %v687
        %v1022 = vpop.f32.mrf.mxu0
        %v1023 = vadd.f32 %v1000, %v1022
        %1024 = vmatmul.f32.gmra.mxu0 %v691
        %v1025 = vpop.f32.mrf.mxu0
        %v1026 = vadd.f32 %v1003, %v1025
        %1027 = vdwg.mxu0
        %1028 = vmatpush.msra.mxu0 %v413
        %1029 = vmatpush.msra.mxu0 %v412
        %1030 = vmatpush.msra.mxu0 %v411
        %1031 = vmatpush.msra.mxu0 %v410
        %1032 = vmatpush.msra.mxu0 %v409
        %1033 = vmatpush.msra.mxu0 %v408
        %1034 = vmatpush.msra.mxu0 %v407
        %1035 = vmatpush.msra.mxu0 %v406
        %1036 = vmatpush.msra.mxu0 %v405
        %1037 = vmatpush.msra.mxu0 %v404
        %1038 = vmatpush.msra.mxu0 %v403
        %1039 = vmatpush.msra.mxu0 %v402
        %1040 = vmatpush.msra.mxu0 %v401
        %1041 = vmatpush.msra.mxu0 %v400
        %1042 = vmatpush.msra.mxu0 %v399
        %1043 = vmatpush.msra.mxu0 %v398
        %1044 = vmatmul.f32.gmra.mxu0 %v688
        %v1045 = vpop.f32.mrf.mxu0
        %v1046 = vadd.f32 %v1023, %v1045
        %1047 = vmatmul.f32.gmra.mxu0 %v692
        %v1048 = vpop.f32.mrf.mxu0
        %v1049 = vadd.f32 %v1026, %v1048
        %1050 = vdwg.mxu0
        %1051 = vmatpush.msra.mxu0 %v429
        %1052 = vmatpush.msra.mxu0 %v428
        %1053 = vmatpush.msra.mxu0 %v427
        %1054 = vmatpush.msra.mxu0 %v426
        %1055 = vmatpush.msra.mxu0 %v425
        %1056 = vmatpush.msra.mxu0 %v424
        %1057 = vmatpush.msra.mxu0 %v423
        %1058 = vmatpush.msra.mxu0 %v422
        %1059 = vmatpush.msra.mxu0 %v421
        %1060 = vmatpush.msra.mxu0 %v420
        %1061 = vmatpush.msra.mxu0 %v419
        %1062 = vmatpush.msra.mxu0 %v418
        %1063 = vmatpush.msra.mxu0 %v417
        %1064 = vmatpush.msra.mxu0 %v416
        %1065 = vmatpush.msra.mxu0 %v415
        %1066 = vmatpush.msra.mxu0 %v414
        %1067 = vmatmul.f32.gmra.mxu0 %v689
        %v1068 = vpop.f32.mrf.mxu0
        %v1069 = vadd.f32 %v1046, %v1068
        %1070 = vmatmul.f32.gmra.mxu0 %v693
        %v1071 = vpop.f32.mrf.mxu0
        %v1072 = vadd.f32 %v1049, %v1071
        %1073 = vdwg.mxu0
        %1074 = vmatpush.msra.mxu0 %v445
        %1075 = vmatpush.msra.mxu0 %v444
        %1076 = vmatpush.msra.mxu0 %v443
        %1077 = vmatpush.msra.mxu0 %v442
        %1078 = vmatpush.msra.mxu0 %v441
        %1079 = vmatpush.msra.mxu0 %v440
        %1080 = vmatpush.msra.mxu0 %v439
        %1081 = vmatpush.msra.mxu0 %v438
        %1082 = vmatpush.msra.mxu0 %v437
        %1083 = vmatpush.msra.mxu0 %v436
        %1084 = vmatpush.msra.mxu0 %v435
        %1085 = vmatpush.msra.mxu0 %v434
        %1086 = vmatpush.msra.mxu0 %v433
        %1087 = vmatpush.msra.mxu0 %v432
        %1088 = vmatpush.msra.mxu0 %v431
        %1089 = vmatpush.msra.mxu0 %v430
        %1090 = vmatmul.f32.gmra.mxu0 %v686
        %v1091 = vpop.f32.mrf.mxu0
        %v1092 = vadd.f32 %v699, %v1091
        %1093 = vmatmul.f32.gmra.mxu0 %v690
        %v1094 = vpop.f32.mrf.mxu0
        %v1095 = vadd.f32 %v704, %v1094
        %1096 = vdwg.mxu0
        %1097 = vmatpush.msra.mxu0 %v461
        %1098 = vmatpush.msra.mxu0 %v460
        %1099 = vmatpush.msra.mxu0 %v459
        %1100 = vmatpush.msra.mxu0 %v458
        %1101 = vmatpush.msra.mxu0 %v457
        %1102 = vmatpush.msra.mxu0 %v456
        %1103 = vmatpush.msra.mxu0 %v455
        %1104 = vmatpush.msra.mxu0 %v454
        %1105 = vmatpush.msra.mxu0 %v453
        %1106 = vmatpush.msra.mxu0 %v452
        %1107 = vmatpush.msra.mxu0 %v451
        %1108 = vmatpush.msra.mxu0 %v450
        %1109 = vmatpush.msra.mxu0 %v449
        %1110 = vmatpush.msra.mxu0 %v448
        %1111 = vmatpush.msra.mxu0 %v447
        %1112 = vmatpush.msra.mxu0 %v446
        %1113 = vmatmul.f32.gmra.mxu0 %v687
        %v1114 = vpop.f32.mrf.mxu0
        %v1115 = vadd.f32 %v1092, %v1114
        %1116 = vmatmul.f32.gmra.mxu0 %v691
        %v1117 = vpop.f32.mrf.mxu0
        %v1118 = vadd.f32 %v1095, %v1117
        %1119 = vdwg.mxu0
        %1120 = vmatpush.msra.mxu0 %v477
        %1121 = vmatpush.msra.mxu0 %v476
        %1122 = vmatpush.msra.mxu0 %v475
        %1123 = vmatpush.msra.mxu0 %v474
        %1124 = vmatpush.msra.mxu0 %v473
        %1125 = vmatpush.msra.mxu0 %v472
        %1126 = vmatpush.msra.mxu0 %v471
        %1127 = vmatpush.msra.mxu0 %v470
        %1128 = vmatpush.msra.mxu0 %v469
        %1129 = vmatpush.msra.mxu0 %v468
        %1130 = vmatpush.msra.mxu0 %v467
        %1131 = vmatpush.msra.mxu0 %v466
        %1132 = vmatpush.msra.mxu0 %v465
        %1133 = vmatpush.msra.mxu0 %v464
        %1134 = vmatpush.msra.mxu0 %v463
        %1135 = vmatpush.msra.mxu0 %v462
        %1136 = vmatmul.f32.gmra.mxu0 %v688
        %v1137 = vpop.f32.mrf.mxu0
        %v1138 = vadd.f32 %v1115, %v1137
        %1139 = vmatmul.f32.gmra.mxu0 %v692
        %v1140 = vpop.f32.mrf.mxu0
        %v1141 = vadd.f32 %v1118, %v1140
        %1142 = vdwg.mxu0
        %1143 = vmatpush.msra.mxu0 %v493
        %1144 = vmatpush.msra.mxu0 %v492
        %1145 = vmatpush.msra.mxu0 %v491
        %1146 = vmatpush.msra.mxu0 %v490
        %1147 = vmatpush.msra.mxu0 %v489
        %1148 = vmatpush.msra.mxu0 %v488
        %1149 = vmatpush.msra.mxu0 %v487
        %1150 = vmatpush.msra.mxu0 %v486
        %1151 = vmatpush.msra.mxu0 %v485
        %1152 = vmatpush.msra.mxu0 %v484
        %1153 = vmatpush.msra.mxu0 %v483
        %1154 = vmatpush.msra.mxu0 %v482
        %1155 = vmatpush.msra.mxu0 %v481
        %1156 = vmatpush.msra.mxu0 %v480
        %1157 = vmatpush.msra.mxu0 %v479
        %1158 = vmatpush.msra.mxu0 %v478
        %1159 = vmatmul.f32.gmra.mxu0 %v689
        %v1160 = vpop.f32.mrf.mxu0
        %v1161 = vadd.f32 %v1138, %v1160
        %1162 = vmatmul.f32.gmra.mxu0 %v693
        %v1163 = vpop.f32.mrf.mxu0
        %v1164 = vadd.f32 %v1141, %v1163
        %1165 = vdwg.mxu0
        %1166 = vmatpush.msra.mxu0 %v509
        %1167 = vmatpush.msra.mxu0 %v508
        %1168 = vmatpush.msra.mxu0 %v507
        %1169 = vmatpush.msra.mxu0 %v506
        %1170 = vmatpush.msra.mxu0 %v505
        %1171 = vmatpush.msra.mxu0 %v504
        %1172 = vmatpush.msra.mxu0 %v503
        %1173 = vmatpush.msra.mxu0 %v502
        %1174 = vmatpush.msra.mxu0 %v501
        %1175 = vmatpush.msra.mxu0 %v500
        %1176 = vmatpush.msra.mxu0 %v499
        %1177 = vmatpush.msra.mxu0 %v498
        %1178 = vmatpush.msra.mxu0 %v497
        %1179 = vmatpush.msra.mxu0 %v496
        %1180 = vmatpush.msra.mxu0 %v495
        %1181 = vmatpush.msra.mxu0 %v494
        %1182 = vmatmul.f32.gmra.mxu0 %v686
        %v1183 = vpop.f32.mrf.mxu0
        %v1184 = vadd.f32 %v699, %v1183
        %1185 = vmatmul.f32.gmra.mxu0 %v690
        %v1186 = vpop.f32.mrf.mxu0
        %v1187 = vadd.f32 %v704, %v1186
        %1188 = vdwg.mxu0
        %1189 = vmatpush.msra.mxu0 %v525
        %1190 = vmatpush.msra.mxu0 %v524
        %1191 = vmatpush.msra.mxu0 %v523
        %1192 = vmatpush.msra.mxu0 %v522
        %1193 = vmatpush.msra.mxu0 %v521
        %1194 = vmatpush.msra.mxu0 %v520
        %1195 = vmatpush.msra.mxu0 %v519
        %1196 = vmatpush.msra.mxu0 %v518
        %1197 = vmatpush.msra.mxu0 %v517
        %1198 = vmatpush.msra.mxu0 %v516
        %1199 = vmatpush.msra.mxu0 %v515
        %1200 = vmatpush.msra.mxu0 %v514
        %1201 = vmatpush.msra.mxu0 %v513
        %1202 = vmatpush.msra.mxu0 %v512
        %1203 = vmatpush.msra.mxu0 %v511
        %1204 = vmatpush.msra.mxu0 %v510
        %1205 = vmatmul.f32.gmra.mxu0 %v687
        %v1206 = vpop.f32.mrf.mxu0
        %v1207 = vadd.f32 %v1184, %v1206
        %1208 = vmatmul.f32.gmra.mxu0 %v691
        %v1209 = vpop.f32.mrf.mxu0
        %v1210 = vadd.f32 %v1187, %v1209
        %1211 = vdwg.mxu0
        %1212 = vmatpush.msra.mxu0 %v541
        %1213 = vmatpush.msra.mxu0 %v540
        %1214 = vmatpush.msra.mxu0 %v539
        %1215 = vmatpush.msra.mxu0 %v538
        %1216 = vmatpush.msra.mxu0 %v537
        %1217 = vmatpush.msra.mxu0 %v536
        %1218 = vmatpush.msra.mxu0 %v535
        %1219 = vmatpush.msra.mxu0 %v534
        %1220 = vmatpush.msra.mxu0 %v533
        %1221 = vmatpush.msra.mxu0 %v532
        %1222 = vmatpush.msra.mxu0 %v531
        %1223 = vmatpush.msra.mxu0 %v530
        %1224 = vmatpush.msra.mxu0 %v529
        %1225 = vmatpush.msra.mxu0 %v528
        %1226 = vmatpush.msra.mxu0 %v527
        %1227 = vmatpush.msra.mxu0 %v526
        %1228 = vmatmul.f32.gmra.mxu0 %v688
        %v1229 = vpop.f32.mrf.mxu0
        %v1230 = vadd.f32 %v1207, %v1229
        %1231 = vmatmul.f32.gmra.mxu0 %v692
        %v1232 = vpop.f32.mrf.mxu0
        %v1233 = vadd.f32 %v1210, %v1232
        %1234 = vdwg.mxu0
        %1235 = vmatpush.msra.mxu0 %v557
        %1236 = vmatpush.msra.mxu0 %v556
        %1237 = vmatpush.msra.mxu0 %v555
        %1238 = vmatpush.msra.mxu0 %v554
        %1239 = vmatpush.msra.mxu0 %v553
        %1240 = vmatpush.msra.mxu0 %v552
        %1241 = vmatpush.msra.mxu0 %v551
        %1242 = vmatpush.msra.mxu0 %v550
        %1243 = vmatpush.msra.mxu0 %v549
        %1244 = vmatpush.msra.mxu0 %v548
        %1245 = vmatpush.msra.mxu0 %v547
        %1246 = vmatpush.msra.mxu0 %v546
        %1247 = vmatpush.msra.mxu0 %v545
        %1248 = vmatpush.msra.mxu0 %v544
        %1249 = vmatpush.msra.mxu0 %v543
        %1250 = vmatpush.msra.mxu0 %v542
        %1251 = vmatmul.f32.gmra.mxu0 %v689
        %v1252 = vpop.f32.mrf.mxu0
        %v1253 = vadd.f32 %v1230, %v1252
        %1254 = vmatmul.f32.gmra.mxu0 %v693
        %v1255 = vpop.f32.mrf.mxu0
        %v1256 = vadd.f32 %v1233, %v1255
        %1257 = vdwg.mxu0
        %1258 = vmatpush.msra.mxu0 %v573
        %1259 = vmatpush.msra.mxu0 %v572
        %1260 = vmatpush.msra.mxu0 %v571
        %1261 = vmatpush.msra.mxu0 %v570
        %1262 = vmatpush.msra.mxu0 %v569
        %1263 = vmatpush.msra.mxu0 %v568
        %1264 = vmatpush.msra.mxu0 %v567
        %1265 = vmatpush.msra.mxu0 %v566
        %1266 = vmatpush.msra.mxu0 %v565
        %1267 = vmatpush.msra.mxu0 %v564
        %1268 = vmatpush.msra.mxu0 %v563
        %1269 = vmatpush.msra.mxu0 %v562
        %1270 = vmatpush.msra.mxu0 %v561
        %1271 = vmatpush.msra.mxu0 %v560
        %1272 = vmatpush.msra.mxu0 %v559
        %1273 = vmatpush.msra.mxu0 %v558
        %1274 = vmatmul.f32.gmra.mxu0 %v686
        %v1275 = vpop.f32.mrf.mxu0
        %v1276 = vadd.f32 %v699, %v1275
        %1277 = vmatmul.f32.gmra.mxu0 %v690
        %v1278 = vpop.f32.mrf.mxu0
        %v1279 = vadd.f32 %v704, %v1278
        %1280 = vdwg.mxu0
        %1281 = vmatpush.msra.mxu0 %v589
        %1282 = vmatpush.msra.mxu0 %v588
        %1283 = vmatpush.msra.mxu0 %v587
        %1284 = vmatpush.msra.mxu0 %v586
        %1285 = vmatpush.msra.mxu0 %v585
        %1286 = vmatpush.msra.mxu0 %v584
        %1287 = vmatpush.msra.mxu0 %v583
        %1288 = vmatpush.msra.mxu0 %v582
        %1289 = vmatpush.msra.mxu0 %v581
        %1290 = vmatpush.msra.mxu0 %v580
        %1291 = vmatpush.msra.mxu0 %v579
        %1292 = vmatpush.msra.mxu0 %v578
        %1293 = vmatpush.msra.mxu0 %v577
        %1294 = vmatpush.msra.mxu0 %v576
        %1295 = vmatpush.msra.mxu0 %v575
        %1296 = vmatpush.msra.mxu0 %v574
        %1297 = vmatmul.f32.gmra.mxu0 %v687
        %v1298 = vpop.f32.mrf.mxu0
        %v1299 = vadd.f32 %v1276, %v1298
        %1300 = vmatmul.f32.gmra.mxu0 %v691
        %v1301 = vpop.f32.mrf.mxu0
        %v1302 = vadd.f32 %v1279, %v1301
        %1303 = vdwg.mxu0
        %1304 = vmatpush.msra.mxu0 %v605
        %1305 = vmatpush.msra.mxu0 %v604
        %1306 = vmatpush.msra.mxu0 %v603
        %1307 = vmatpush.msra.mxu0 %v602
        %1308 = vmatpush.msra.mxu0 %v601
        %1309 = vmatpush.msra.mxu0 %v600
        %1310 = vmatpush.msra.mxu0 %v599
        %1311 = vmatpush.msra.mxu0 %v598
        %1312 = vmatpush.msra.mxu0 %v597
        %1313 = vmatpush.msra.mxu0 %v596
        %1314 = vmatpush.msra.mxu0 %v595
        %1315 = vmatpush.msra.mxu0 %v594
        %1316 = vmatpush.msra.mxu0 %v593
        %1317 = vmatpush.msra.mxu0 %v592
        %1318 = vmatpush.msra.mxu0 %v591
        %1319 = vmatpush.msra.mxu0 %v590
        %1320 = vmatmul.f32.gmra.mxu0 %v688
        %v1321 = vpop.f32.mrf.mxu0
        %v1322 = vadd.f32 %v1299, %v1321
        %1323 = vmatmul.f32.gmra.mxu0 %v692
        %v1324 = vpop.f32.mrf.mxu0
        %v1325 = vadd.f32 %v1302, %v1324
        %1326 = vdwg.mxu0
        %1327 = vmatpush.msra.mxu0 %v621
        %1328 = vmatpush.msra.mxu0 %v620
        %1329 = vmatpush.msra.mxu0 %v619
        %1330 = vmatpush.msra.mxu0 %v618
        %1331 = vmatpush.msra.mxu0 %v617
        %1332 = vmatpush.msra.mxu0 %v616
        %1333 = vmatpush.msra.mxu0 %v615
        %1334 = vmatpush.msra.mxu0 %v614
        %1335 = vmatpush.msra.mxu0 %v613
        %1336 = vmatpush.msra.mxu0 %v612
        %1337 = vmatpush.msra.mxu0 %v611
        %1338 = vmatpush.msra.mxu0 %v610
        %1339 = vmatpush.msra.mxu0 %v609
        %1340 = vmatpush.msra.mxu0 %v608
        %1341 = vmatpush.msra.mxu0 %v607
        %1342 = vmatpush.msra.mxu0 %v606
        %1343 = vmatmul.f32.gmra.mxu0 %v689
        %v1344 = vpop.f32.mrf.mxu0
        %v1345 = vadd.f32 %v1322, %v1344
        %1346 = vmatmul.f32.gmra.mxu0 %v693
        %v1347 = vpop.f32.mrf.mxu0
        %v1348 = vadd.f32 %v1325, %v1347
        %1349 = vdwg.mxu0
        %1350 = vmatpush.msra.mxu0 %v637
        %1351 = vmatpush.msra.mxu0 %v636
        %1352 = vmatpush.msra.mxu0 %v635
        %1353 = vmatpush.msra.mxu0 %v634
        %1354 = vmatpush.msra.mxu0 %v633
        %1355 = vmatpush.msra.mxu0 %v632
        %1356 = vmatpush.msra.mxu0 %v631
        %1357 = vmatpush.msra.mxu0 %v630
        %1358 = vmatpush.msra.mxu0 %v629
        %1359 = vmatpush.msra.mxu0 %v628
        %1360 = vmatpush.msra.mxu0 %v627
        %1361 = vmatpush.msra.mxu0 %v626
        %1362 = vmatpush.msra.mxu0 %v625
        %1363 = vmatpush.msra.mxu0 %v624
        %1364 = vmatpush.msra.mxu0 %v623
        %1365 = vmatpush.msra.mxu0 %v622
        %1366 = vmatmul.f32.gmra.mxu0 %v686
        %v1367 = vpop.f32.mrf.mxu0
        %v1368 = vadd.f32 %v699, %v1367
        %1369 = vmatmul.f32.gmra.mxu0 %v690
        %v1370 = vpop.f32.mrf.mxu0
        %v1371 = vadd.f32 %v704, %v1370
        %1372 = vdwg.mxu0
        %1373 = vmatpush.msra.mxu0 %v653
        %1374 = vmatpush.msra.mxu0 %v652
        %1375 = vmatpush.msra.mxu0 %v651
        %1376 = vmatpush.msra.mxu0 %v650
        %1377 = vmatpush.msra.mxu0 %v649
        %1378 = vmatpush.msra.mxu0 %v648
        %1379 = vmatpush.msra.mxu0 %v647
        %1380 = vmatpush.msra.mxu0 %v646
        %1381 = vmatpush.msra.mxu0 %v645
        %1382 = vmatpush.msra.mxu0 %v644
        %1383 = vmatpush.msra.mxu0 %v643
        %1384 = vmatpush.msra.mxu0 %v642
        %1385 = vmatpush.msra.mxu0 %v641
        %1386 = vmatpush.msra.mxu0 %v640
        %1387 = vmatpush.msra.mxu0 %v639
        %1388 = vmatpush.msra.mxu0 %v638
        %1389 = vmatmul.f32.gmra.mxu0 %v687
        %v1390 = vpop.f32.mrf.mxu0
        %v1391 = vadd.f32 %v1368, %v1390
        %1392 = vmatmul.f32.gmra.mxu0 %v691
        %v1393 = vpop.f32.mrf.mxu0
        %v1394 = vadd.f32 %v1371, %v1393
        %1395 = vdwg.mxu0
        %1396 = vmatpush.msra.mxu0 %v669
        %1397 = vmatpush.msra.mxu0 %v668
        %1398 = vmatpush.msra.mxu0 %v667
        %1399 = vmatpush.msra.mxu0 %v666
        %1400 = vmatpush.msra.mxu0 %v665
        %1401 = vmatpush.msra.mxu0 %v664
        %1402 = vmatpush.msra.mxu0 %v663
        %1403 = vmatpush.msra.mxu0 %v662
        %1404 = vmatpush.msra.mxu0 %v661
        %1405 = vmatpush.msra.mxu0 %v660
        %1406 = vmatpush.msra.mxu0 %v659
        %1407 = vmatpush.msra.mxu0 %v658
        %1408 = vmatpush.msra.mxu0 %v657
        %1409 = vmatpush.msra.mxu0 %v656
        %1410 = vmatpush.msra.mxu0 %v655
        %1411 = vmatpush.msra.mxu0 %v654
        %1412 = vmatmul.f32.gmra.mxu0 %v688
        %v1413 = vpop.f32.mrf.mxu0
        %v1414 = vadd.f32 %v1391, %v1413
        %1415 = vmatmul.f32.gmra.mxu0 %v692
        %v1416 = vpop.f32.mrf.mxu0
        %v1417 = vadd.f32 %v1394, %v1416
        %1418 = vdwg.mxu0
        %1419 = vmatpush.msra.mxu0 %v685
        %1420 = vmatpush.msra.mxu0 %v684
        %1421 = vmatpush.msra.mxu0 %v683
        %1422 = vmatpush.msra.mxu0 %v682
        %1423 = vmatpush.msra.mxu0 %v681
        %1424 = vmatpush.msra.mxu0 %v680
        %1425 = vmatpush.msra.mxu0 %v679
        %1426 = vmatpush.msra.mxu0 %v678
        %1427 = vmatpush.msra.mxu0 %v677
        %1428 = vmatpush.msra.mxu0 %v676
        %1429 = vmatpush.msra.mxu0 %v675
        %1430 = vmatpush.msra.mxu0 %v674
        %1431 = vmatpush.msra.mxu0 %v673
        %1432 = vmatpush.msra.mxu0 %v672
        %1433 = vmatpush.msra.mxu0 %v671
        %1434 = vmatpush.msra.mxu0 %v670
        %1435 = vmatmul.f32.gmra.mxu0 %v689
        %v1436 = vpop.f32.mrf.mxu0
        %v1437 = vadd.f32 %v1414, %v1436
        %1438 = vmatmul.f32.gmra.mxu0 %v693
        %v1439 = vpop.f32.mrf.mxu0
        %v1440 = vadd.f32 %v1417, %v1439
        %1441 = vdwg.mxu0
        %v1442 = vmax.f32 %v793, 0.0
        %v1443 = vmax.f32 %v796, 0.0
        %v1444 = vmax.f32 %v885, 0.0
        %v1445 = vmax.f32 %v888, 0.0
        %v1446 = vmax.f32 %v977, 0.0
        %v1447 = vmax.f32 %v980, 0.0
        %v1448 = vmax.f32 %v1069, 0.0
        %v1449 = vmax.f32 %v1072, 0.0
        %v1450 = vmax.f32 %v1161, 0.0
        %v1451 = vmax.f32 %v1164, 0.0
        %v1452 = vmax.f32 %v1253, 0.0
        %v1453 = vmax.f32 %v1256, 0.0
        %v1454 = vmax.f32 %v1345, 0.0
        %v1455 = vmax.f32 %v1348, 0.0
        %v1456 = vmax.f32 %v1437, 0.0
        %v1457 = vmax.f32 %v1440, 0.0
        %vm1458 = vcmask 523264
        %v1459 = vsel %vm1458, %v1442, 0.0
        %1460 = vadd.xlane.f32.xlu0 %v1459
        %v1461 = vpop.xlane.xlu0 %1460
        %vm1462 = vcmask 517120
        %v1463 = vsel %vm1462, %v1443, 0.0
        %1464 = vadd.xlane.f32.xlu0 %v1463
        %v1465 = vpop.xlane.xlu0 %1464
        %v1466 = vsel %vm1458, %v1444, 0.0
        %1467 = vadd.xlane.f32.xlu0 %v1466
        %v1468 = vpop.xlane.xlu0 %1467
        %v1469 = vsel %vm1462, %v1445, 0.0
        %1470 = vadd.xlane.f32.xlu0 %v1469
        %v1471 = vpop.xlane.xlu0 %1470
        %v1472 = vsel %vm1458, %v1446, 0.0
        %1473 = vadd.xlane.f32.xlu0 %v1472
        %v1474 = vpop.xlane.xlu0 %1473
        %v1475 = vsel %vm1462, %v1447, 0.0
        %1476 = vadd.xlane.f32.xlu0 %v1475
        %v1477 = vpop.xlane.xlu0 %1476
        %v1478 = vsel %vm1458, %v1448, 0.0
        %1479 = vadd.xlane.f32.xlu0 %v1478
        %v1480 = vpop.xlane.xlu0 %1479
        %v1481 = vsel %vm1462, %v1449, 0.0
        %1482 = vadd.xlane.f32.xlu0 %v1481
        %v1483 = vpop.xlane.xlu0 %1482
        %v1484 = vsel %vm1458, %v1450, 0.0
        %1485 = vadd.xlane.f32.xlu0 %v1484
        %v1486 = vpop.xlane.xlu0 %1485
        %v1487 = vsel %vm1462, %v1451, 0.0
        %1488 = vadd.xlane.f32.xlu0 %v1487
        %v1489 = vpop.xlane.xlu0 %1488
        %v1490 = vsel %vm1458, %v1452, 0.0
        %1491 = vadd.xlane.f32.xlu0 %v1490
        %v1492 = vpop.xlane.xlu0 %1491
        %v1493 = vsel %vm1462, %v1453, 0.0
        %1494 = vadd.xlane.f32.xlu0 %v1493
        %v1495 = vpop.xlane.xlu0 %1494
        %v1496 = vsel %vm1458, %v1454, 0.0
        %1497 = vadd.xlane.f32.xlu0 %v1496
        %v1498 = vpop.xlane.xlu0 %1497
        %v1499 = vsel %vm1462, %v1455, 0.0
        %1500 = vadd.xlane.f32.xlu0 %v1499
        %v1501 = vpop.xlane.xlu0 %1500
        %v1502 = vsel %vm1458, %v1456, 0.0
        %1503 = vadd.xlane.f32.xlu0 %v1502
        %v1504 = vpop.xlane.xlu0 %1503
        %v1505 = vsel %vm1462, %v1457, 0.0
        %1506 = vadd.xlane.f32.xlu0 %v1505
        %v1507 = vpop.xlane.xlu0 %1506
        %v1508 = vmul.f32 %v1461, 0.015625
        %v1509 = vmul.f32 %v1465, 0.015625
        %v1510 = vmul.f32 %v1468, 0.015625
        %v1511 = vmul.f32 %v1471, 0.015625
        %v1512 = vmul.f32 %v1474, 0.015625
        %v1513 = vmul.f32 %v1477, 0.015625
        %v1514 = vmul.f32 %v1480, 0.015625
        %v1515 = vmul.f32 %v1483, 0.015625
        %v1516 = vmul.f32 %v1486, 0.015625
        %v1517 = vmul.f32 %v1489, 0.015625
        %v1518 = vmul.f32 %v1492, 0.015625
        %v1519 = vmul.f32 %v1495, 0.015625
        %v1520 = vmul.f32 %v1498, 0.015625
        %v1521 = vmul.f32 %v1501, 0.015625
        %v1522 = vmul.f32 %v1504, 0.015625
        %v1523 = vmul.f32 %v1507, 0.015625
        %v1540 = vlaneseq
        %v1541 = vand.u32 %v1540, 127
        %v1542 = vperm.slane %v1508, %v1541
        %v1543 = vadd.s32 %v1541, 4294967288
        %v1544 = vperm.slane %v1509, %v1543
        %vm1545 = vcmask 130112
        %v1546 = vsel %vm1545, %v1544, %v1542
        %v1547 = vperm.slane %v1510, %v1541
        %v1548 = vperm.slane %v1511, %v1543
        %v1549 = vsel %vm1545, %v1548, %v1547
        %v1550 = vperm.slane %v1512, %v1541
        %v1551 = vperm.slane %v1513, %v1543
        %v1552 = vsel %vm1545, %v1551, %v1550
        %v1553 = vperm.slane %v1514, %v1541
        %v1554 = vperm.slane %v1515, %v1543
        %v1555 = vsel %vm1545, %v1554, %v1553
        %v1556 = vperm.slane %v1516, %v1541
        %v1557 = vperm.slane %v1517, %v1543
        %v1558 = vsel %vm1545, %v1557, %v1556
        %v1559 = vperm.slane %v1518, %v1541
        %v1560 = vperm.slane %v1519, %v1543
        %v1561 = vsel %vm1545, %v1560, %v1559
        %v1562 = vperm.slane %v1520, %v1541
        %v1563 = vperm.slane %v1521, %v1543
        %v1564 = vsel %vm1545, %v1563, %v1562
        %v1565 = vperm.slane %v1522, %v1541
        %v1566 = vperm.slane %v1523, %v1543
        %v1567 = vsel %vm1545, %v1566, %v1565
        %vm1568 = vcmask 1041409
        %v1569 = vsel %vm1568, %v1549, %v1546
        %vm1570 = vcmask 1042434
        %v1571 = vsel %vm1570, %v1552, %v1569
        %vm1572 = vcmask 1043459
        %v1573 = vsel %vm1572, %v1555, %v1571
        %vm1574 = vcmask 1044484
        %v1575 = vsel %vm1574, %v1558, %v1573
        %vm1576 = vcmask 1045509
        %v1577 = vsel %vm1576, %v1561, %v1575
        %vm1578 = vcmask 1046534
        %v1579 = vsel %vm1578, %v1564, %v1577
        %vm1580 = vcmask 1047559
        %v1581 = vsel %vm1580, %v1567, %v1579
        %vm1583 = vcmask 80896
        %1584 = vst.msk [vmem:[%s166] sm:$0xff] %vm1583, %v1581
        %s1585 = sand.u32 %s93, 1
        %s1586 = scalar_lea.sflag [#allocation3], %s1585
        %s1587 = sand.u32 %s93, 1
        %s1588 = smul.addr %s1587, 8
        %s1589 = scalar_lea.vmem [#allocation2], %s1588
        // Predicated region
        $region33: #{tpu_custom_call.1} parent=31 // pred_check
          %p1590 = pneg %p103
        $region34: #{tpu_custom_call.1} parent=31 // pred_check_branch
          %1592 = sbr.rel (%p1590) target = $region36
        $region35: #{tpu_custom_call.1} parent=31 // pred_region
          %1594 = vsyncadd %s1586, 0
          %s1595 = smul.addr %s17, 8
          %s1596 = scalar_lea.hbm %s3, %s1595
          %s1598 = sshll.u32 %s1589, 4
          %s1599 = int_to_ptr.vmem [resolvable:$true] %s1598
          %s1600 = sshll.u32 %s1596, 4
          %s1601 = int_to_ptr.hbm [resolvable:$true] %s1600
          %1603 = dma.vmem_to_hbm [thread:$0]  %s1599, 128, %s1601, %s1586
        $region36: #{tpu_custom_call.1} parent=31 // pred_fallthru
          _
      $region32: #{tpu_custom_call.1} parent=5 // pred_fallthru
        _
      %p1604 = scmp.le.s32.totalorder 2, %s12
      // Predicated region
      $region37: #{tpu_custom_call.1} parent=5 // pred_check
        %p1605 = pneg %p1604
      $region38: #{tpu_custom_call.1} parent=5 // pred_check_branch
        %1607 = sbr.rel (%p1605) target = $region40
      $region39: #{tpu_custom_call.1} parent=5 // pred_region
        %s1608 = ssub.s32 %s12, 2
        // Predicated region
        $region41: #{tpu_custom_call.1} parent=39 // pred_check
          %p1609 = pneg %p109
        $region42: #{tpu_custom_call.1} parent=39 // pred_check_branch
          %1611 = sbr.rel (%p1609) target = $region44
        $region43: #{tpu_custom_call.1} parent=39 // pred_region
          %s1612 = sand.u32 %s94, 1
          %s1613 = scalar_lea.sflag [#allocation3], %s1612
          %s1614 = sand.u32 %s94, 1
          %s1615 = smul.addr %s1614, 8
          %s1616 = scalar_lea.vmem [#allocation2], %s1615
          %1618 = dma.done %s1613, 128
        $region44: #{tpu_custom_call.1} parent=39 // pred_fallthru
          _
      $region40: #{tpu_custom_call.1} parent=5 // pred_fallthru
        _
    $region6: #{tpu_custom_call.1} parent=1 // loop_footer
      %s16 = sadd.s32 1, %s12
    $region7: #{tpu_custom_call.1} parent=1 // loop_footer_branch
      %11 = sbr.rel target = $region3
    $region8: #{tpu_custom_call.1} parent=1 // loop_exit
      _
    %1619 = vsyncpa [#allocation3], 1
    %s1620 = scalar_lea.sflag [#allocation3], 1
    %1621 = vsyncpa %s1620, 1

</llo_original>
